<compile_context>
chip_gen: v6e
topology: v6e:2x2x1
jax: 0.10.0
libtpu: 0.0.40
codegen_flags: <defaults>
</compile_context>

<pallas_src>
import functools

import jax
import jax.numpy as jnp
from jax.experimental import pallas as pl
from jax.experimental.pallas import tpu as pltpu

_VMEM_LIMIT = 32 * 1024 * 1024        # scoped VMEM budget (safe on v5e/v6e/v7x)
_FUSED_ACT_BUDGET = 8 * 1024 * 1024   # resident-activation budget for fused path


def _round_up(x, m):
    return ((x + m - 1) // m) * m


# ----------------------------------------------------------------------------
# Shared helpers: streaming BatchNorm statistics (Chan combine) + folding.
# ----------------------------------------------------------------------------
def _accumulate_batch_stats(y, i, tile_m, m_total, mean_acc, m2_acc):
    """Update resident (1, Cp) mean / M2 accumulators with one (tile_m, Cp) tile."""
    n_b = jnp.minimum(tile_m, m_total - i * tile_m)               # valid rows
    ones_mask = (jax.lax.broadcasted_iota(jnp.int32, (8, tile_m), 1)
                 < n_b).astype(jnp.float32)                       # (8, tile_m)
    col_mask = (jax.lax.broadcasted_iota(jnp.int32, (tile_m, 1), 0)
                < n_b).astype(jnp.float32)                        # (tile_m, 1)

    # Per-channel column sums on the MXU (ones-row matmul); row 0 holds the sum.
    n_bf = n_b.astype(jnp.float32)
    s = jnp.dot(ones_mask, y, preferred_element_type=jnp.float32)[0:1, :]
    m_b = s * (1.0 / n_bf)                                        # tile mean (1,Cp)
    d = (y - m_b) * col_mask
    css = jnp.dot(ones_mask, d * d, preferred_element_type=jnp.float32)[0:1, :]

    # Chan parallel-variance combine (numerically robust streaming batch stats).
    n_af = (i * tile_m).astype(jnp.float32)                       # rows already seen
    n_abf = n_af + n_bf
    mean_a = mean_acc[...]
    delta = m_b - mean_a
    mean_acc[...] = mean_a + delta * (n_bf / n_abf)
    m2_acc[...] = m2_acc[...] + css + (delta * delta) * (n_af * n_bf / n_abf)


def _fold_scale_shift(mean_acc, m2_acc, g_ref, b_ref, m_total, eps):
    mean = mean_acc[...]
    var = m2_acc[...] * (1.0 / float(m_total))                    # biased (BN train)
    rstd = jax.lax.rsqrt(var + eps)
    scale = g_ref[...] * rstd
    shift = b_ref[...] - mean * scale
    return scale, shift


# ----------------------------------------------------------------------------
# Fused single-call kernel: GEMM + streaming stats with the whole output
# resident in VMEM; affine + ReLU applied in place at the last grid step.
# ----------------------------------------------------------------------------
def _conv_bn_fused_kernel(p_ref, w_ref, g_ref, b_ref, o_ref,
                          mean_acc, m2_acc, *, m_total, tile_m, eps, use_relu):
    i = pl.program_id(0)
    last = pl.num_programs(0) - 1

    @pl.when(i == 0)
    def _init():
        mean_acc[...] = jnp.zeros_like(mean_acc)
        m2_acc[...] = jnp.zeros_like(m2_acc)

    # MXU GEMM: bf16 operands, f32 accumulation; store tile into resident output.
    y = jnp.dot(p_ref[...], w_ref[...], preferred_element_type=jnp.float32)
    row0 = pl.multiple_of(i * tile_m, 8)
    o_ref[pl.ds(row0, tile_m), :] = y

    _accumulate_batch_stats(y, i, tile_m, m_total, mean_acc, m2_acc)

    @pl.when(i == last)
    def _finalize():
        scale, shift = _fold_scale_shift(mean_acc, m2_acc, g_ref, b_ref,
                                         m_total, eps)
        out = o_ref[...] * scale + shift
        if use_relu:
            out = jnp.maximum(out, 0.0)
        o_ref[...] = out


# ----------------------------------------------------------------------------
# Two-pass streaming path (large activations).
# Pass 1: GEMM + streaming stats; writes pre-BN y and folded (scale, shift).
# ----------------------------------------------------------------------------
def _conv_stats_kernel(p_ref, w_ref, g_ref, b_ref,
                       y_ref, scale_ref, shift_ref,
                       mean_acc, m2_acc, *, m_total, tile_m, eps):
    i = pl.program_id(0)
    last = pl.num_programs(0) - 1

    @pl.when(i == 0)
    def _init():
        mean_acc[...] = jnp.zeros_like(mean_acc)
        m2_acc[...] = jnp.zeros_like(m2_acc)

    y = jnp.dot(p_ref[...], w_ref[...], preferred_element_type=jnp.float32)
    y_ref[...] = y

    _accumulate_batch_stats(y, i, tile_m, m_total, mean_acc, m2_acc)

    @pl.when(i == last)
    def _finalize():
        scale, shift = _fold_scale_shift(mean_acc, m2_acc, g_ref, b_ref,
                                         m_total, eps)
        scale_ref[...] = scale
        shift_ref[...] = shift


# Pass 2: y * scale + shift (+ ReLU), tiled over M, parallel grid axis.
def _bn_apply_kernel(y_ref, scale_ref, shift_ref, o_ref, *, use_relu):
    y = y_ref[...] * scale_ref[...] + shift_ref[...]
    if use_relu:
        y = jnp.maximum(y, 0.0)
    o_ref[...] = y


# ----------------------------------------------------------------------------
# One StridedConv layer: im2col (bf16) -> Pallas conv+BN(+ReLU) -> NHWC output.
# ----------------------------------------------------------------------------
def _strided_conv_bn_layer(x_nhwc, w_oihw, gamma, beta, use_relu, *,
                           block_m=512, eps=1e-5, force_two_pass=False):
    N, H, W, C = x_nhwc.shape
    cout = w_oihw.shape[0]
    cp = _round_up(cout, 128)          # lane-dense channel dim (unmasked stores)

    # im2col for 3x3 / stride 2 / pad 1, built directly in bf16 (halves the
    # patch HBM bytes and matches the bf16 MXU feed).
    ho = (H - 1) // 2 + 1
    wo = (W - 1) // 2 + 1
    xp = jnp.pad(x_nhwc.astype(jnp.bfloat16), ((0, 0), (1, 1), (1, 1), (0, 0)))
    taps = [xp[:, ky:ky + 2 * ho:2, kx:kx + 2 * wo:2, :]
            for ky in range(3) for kx in range(3)]
    patches = jnp.concatenate(taps, axis=-1).reshape(N * ho * wo, 9 * C)

    m = N * ho * wo
    k = 9 * C
    block_m = _round_up(block_m, 16)                   # bf16 sublane packing
    tile_m = max(16, min(block_m, _round_up(m, 16)))
    g = pl.cdiv(m, tile_m)
    m_pad = g * tile_m
    if m_pad != m:
        patches = jnp.pad(patches, ((0, m_pad - m), (0, 0)))

    # (Cout, Cin, 3, 3) -> (9*Cin, Cp): (ky, kx, cin) row order matches patches.
    wmat = jnp.transpose(w_oihw, (2, 3, 1, 0)).reshape(k, cout)
    wmat = jnp.pad(wmat, ((0, 0), (0, cp - cout))).astype(jnp.bfloat16)
    gamma_p = jnp.pad(gamma.astype(jnp.float32), ((0, 0), (0, cp - cout)))
    beta_p = jnp.pad(beta.astype(jnp.float32), ((0, 0), (0, cp - cout)))

    gemm_flops = 2 * m_pad * k * cp
    stats_flops = 2 * 2 * 8 * m_pad * cp          # two ones-matmuls per tile

    use_fused = (not force_two_pass) and (m_pad * cp * 4 <= _FUSED_ACT_BUDGET)

    if use_fused:
        # ---------------- fused path: output resident in VMEM -----------------
        kernel = functools.partial(_conv_bn_fused_kernel, m_total=m,
                                   tile_m=tile_m, eps=eps, use_relu=use_relu)
        out = pl.pallas_call(
            kernel,
            out_shape=jax.ShapeDtypeStruct((m_pad, cp), jnp.float32),
            grid_spec=pltpu.PrefetchScalarGridSpec(
                num_scalar_prefetch=0,
                grid=(g,),
                in_specs=[
                    pl.BlockSpec((tile_m, k), lambda i: (i, 0)),
                    pl.BlockSpec((k, cp), lambda i: (0, 0)),
                    pl.BlockSpec((1, cp), lambda i: (0, 0)),
                    pl.BlockSpec((1, cp), lambda i: (0, 0)),
                ],
                out_specs=pl.BlockSpec((m_pad, cp), lambda i: (0, 0)),
                scratch_shapes=[pltpu.VMEM((1, cp), jnp.float32),
                                pltpu.VMEM((1, cp), jnp.float32)],
            ),
            compiler_params=pltpu.CompilerParams(
                dimension_semantics=("arbitrary",),   # resident output + stats
                vmem_limit_bytes=_VMEM_LIMIT,
            ),
            cost_estimate=pl.CostEstimate(
                flops=gemm_flops + stats_flops + 3 * m_pad * cp,
                transcendentals=cp,
                bytes_accessed=(patches.size * 2 + wmat.size * 2
                                + m_pad * cp * 4 + 2 * cp * 4)),
        )(patches, wmat, gamma_p, beta_p)
        return out[:m, :cout].reshape(N, ho, wo, cout)

    # ------------------- pass 1: GEMM + streaming BN stats --------------------
    stats_kernel = functools.partial(_conv_stats_kernel, m_total=m,
                                     tile_m=tile_m, eps=eps)
    y, scale, shift = pl.pallas_call(
        stats_kernel,
        out_shape=(jax.ShapeDtypeStruct((m_pad, cp), jnp.float32),
                   jax.ShapeDtypeStruct((1, cp), jnp.float32),
                   jax.ShapeDtypeStruct((1, cp), jnp.float32)),
        grid_spec=pltpu.PrefetchScalarGridSpec(
            num_scalar_prefetch=0,
            grid=(g,),
            in_specs=[
                pl.BlockSpec((tile_m, k), lambda i: (i, 0)),
                pl.BlockSpec((k, cp), lambda i: (0, 0)),
                pl.BlockSpec((1, cp), lambda i: (0, 0)),
                pl.BlockSpec((1, cp), lambda i: (0, 0)),
            ],
            out_specs=[
                pl.BlockSpec((tile_m, cp), lambda i: (i, 0)),
                pl.BlockSpec((1, cp), lambda i: (0, 0)),
                pl.BlockSpec((1, cp), lambda i: (0, 0)),
            ],
            scratch_shapes=[pltpu.VMEM((1, cp), jnp.float32),
                            pltpu.VMEM((1, cp), jnp.float32)],
        ),
        compiler_params=pltpu.CompilerParams(
            dimension_semantics=("arbitrary",),       # resident stats accumulator
            vmem_limit_bytes=_VMEM_LIMIT,
        ),
        cost_estimate=pl.CostEstimate(
            flops=gemm_flops + stats_flops, transcendentals=cp,
            bytes_accessed=(patches.size * 2 + wmat.size * 2
                            + m_pad * cp * 4 + 4 * cp * 4)),
    )(patches, wmat, gamma_p, beta_p)

    # --------------------- pass 2: affine + ReLU (parallel) -------------------
    apply_kernel = functools.partial(_bn_apply_kernel, use_relu=use_relu)
    out = pl.pallas_call(
        apply_kernel,
        out_shape=jax.ShapeDtypeStruct((m_pad, cp), jnp.float32),
        grid_spec=pltpu.PrefetchScalarGridSpec(
            num_scalar_prefetch=0,
            grid=(g,),
            in_specs=[
                pl.BlockSpec((tile_m, cp), lambda i: (i, 0)),
                pl.BlockSpec((1, cp), lambda i: (0, 0)),
                pl.BlockSpec((1, cp), lambda i: (0, 0)),
            ],
            out_specs=pl.BlockSpec((tile_m, cp), lambda i: (i, 0)),
        ),
        compiler_params=pltpu.CompilerParams(
            dimension_semantics=("parallel",),
            vmem_limit_bytes=_VMEM_LIMIT,
        ),
        cost_estimate=pl.CostEstimate(
            flops=2 * m_pad * cp, transcendentals=0,
            bytes_accessed=2 * m_pad * cp * 4 + 2 * cp * 4),
        input_output_aliases={0: 0},   # normalize in place of the pre-BN buffer
    )(y, scale, shift)

    return out[:m, :cout].reshape(N, ho, wo, cout)


# ----------------------------------------------------------------------------
# ShallowExpert parameters + forward
# ----------------------------------------------------------------------------
def init_shallow_expert_params(key, input_dim, depth):
    params, relu_flags = [], []
    for d in range(depth):
        cin = input_dim * 2 ** d
        cout = input_dim * 2 ** (d + 1)
        key, kw, kg, kb = jax.random.split(key, 4)
        w = jax.random.normal(kw, (cout, cin, 3, 3), jnp.float32) * jnp.sqrt(2.0 / (cin * 9))
        gamma = jax.random.uniform(kg, (1, cout), jnp.float32, 0.5, 1.5)
        beta = 0.1 * jax.random.normal(kb, (1, cout), jnp.float32)
        params.append(dict(w=w, gamma=gamma, beta=beta))
        relu_flags.append(d != 1)       # StridedConv uses ReLU unless k == 1
    return params, tuple(relu_flags)


def shallow_expert_forward(x_nchw, params, relu_flags, *, block_m=512,
                           force_two_pass=False):
    """x_nchw: (N, C, H, W) f32 -> (N, C * 2**depth, H / 2**depth, W / 2**depth)."""
    x = jnp.transpose(x_nchw, (0, 2, 3, 1)).astype(jnp.float32)   # NCHW -> NHWC
    for layer, use_relu in zip(params, relu_flags):
        x = _strided_conv_bn_layer(x, layer["w"], layer["gamma"], layer["beta"],
                                   use_relu, block_m=block_m,
                                   force_two_pass=force_two_pass)
    return jnp.transpose(x, (0, 3, 1, 2))                         # NHWC -> NCHW


# ----------------------------------------------------------------------------
# Pure-JAX references (conv_dtype=bf16 mirrors the kernel's MXU numerics).
# ----------------------------------------------------------------------------
def _reference_forward(x_nchw, params, relu_flags, *, conv_dtype=jnp.float32, eps=1e-5):
    x = jnp.transpose(x_nchw, (0, 2, 3, 1)).astype(jnp.float32)
    for layer, use_relu in zip(params, relu_flags):
        w_hwio = jnp.transpose(layer["w"], (2, 3, 1, 0))
        y = jax.lax.conv_general_dilated(
            x.astype(conv_dtype), w_hwio.astype(conv_dtype),
            window_strides=(2, 2), padding=((1, 1), (1, 1)),
            dimension_numbers=("NHWC", "HWIO", "NHWC"),
            preferred_element_type=jnp.float32)
        mean = y.mean(axis=(0, 1, 2))
        var = y.var(axis=(0, 1, 2))     # biased, as in BN training forward
        y = (y - mean) * jax.lax.rsqrt(var + eps)
        y = y * layer["gamma"][0] + layer["beta"][0]
        if use_relu:
            y = jnp.maximum(y, 0.0)
        x = y
    return jnp.transpose(x, (0, 3, 1, 2))


if __name__ == "__main__":
    key = jax.random.PRNGKey(0)
    k_x, k_p = jax.random.split(key)

    N, C, H, W = 2, 4, 16, 16          # input_dim = 4
    depth = 2
    x = jax.random.normal(k_x, (N, C, H, W), jnp.float32)
    params, relu_flags = init_shallow_expert_params(k_p, input_dim=C, depth=depth)

    @functools.partial(jax.jit, static_argnums=(2, 3, 4))
    def fwd(x_, params_, relu_flags_, block_m_, force_two_pass_):
        return shallow_expert_forward(x_, params_, relu_flags_,
                                      block_m=block_m_,
                                      force_two_pass=force_two_pass_)

    # block_m=48 at demo scale exercises the multi-tile streaming-BN path
    # (layer 0: M = 2*8*8 = 128 rows -> 3 tiles with a ragged, masked last tile).
    out = jax.block_until_ready(fwd(x, params, relu_flags, 48, False))        # fused
    out_two_pass = jax.block_until_ready(fwd(x, params, relu_flags, 48, True))  # streaming

    expected_shape = (N, C * 2 ** depth, H // 2 ** depth, W // 2 ** depth)
    assert out.shape == expected_shape, (out.shape, expected_shape)
    assert out_two_pass.shape == expected_shape, out_two_pass.shape

    # Matched-precision reference (bf16 conv operands, f32 accumulation / BN):
    # tight check of the kernel mechanics (tiling, streaming stats, padding).
    ref_bf16 = jax.block_until_ready(
        _reference_forward(x, params, relu_flags, conv_dtype=jnp.bfloat16))
    err_fused = float(jnp.max(jnp.abs(out - ref_bf16)))
    err_stream = float(jnp.max(jnp.abs(out_two_pass - ref_bf16)))
    assert err_fused < 5e-3, err_fused
    assert err_stream < 5e-3, err_stream

    # Full-f32 reference: semantic check (bf16 MXU inputs cost ~1e-2 abs error).
    ref_f32 = jax.block_until_ready(
        _reference_forward(x, params, relu_flags, conv_dtype=jnp.float32))
    err_f32 = float(jnp.max(jnp.abs(out - ref_f32)))
    assert err_f32 < 5e-2, err_f32

    print("KERNEL_OK")
</pallas_src>

<mosaic_0001>
module attributes {stable_mosaic.version = 11 : i64} {
  func.func @_conv_bn_fused_kernel(%arg0: i32, %arg1: memref<48x36xbf16, #tpu.memory_space<vmem>>, %arg2: memref<36x128xbf16, #tpu.memory_space<vmem>>, %arg3: memref<1x128xf32, #tpu.memory_space<vmem>>, %arg4: memref<1x128xf32, #tpu.memory_space<vmem>>, %arg5: memref<144x128xf32, #tpu.memory_space<vmem>>, %arg6: memref<1x128xf32, #tpu.memory_space<vmem>>, %arg7: memref<1x128xf32, #tpu.memory_space<vmem>>) attributes {dimension_semantics = [#tpu.dimension_semantics<arbitrary>], iteration_bounds = array<i64: 3>, scalar_prefetch = 0 : i64, scratch_operands = 2 : i64, tpu.core_type = #tpu.core_type<tc>, window_params = [{transform_indices = @transform_0, window_bounds = array<i64: 48, 36>}, {pipeline_mode = #tpu.pipeline_mode<synchronous>, transform_indices = @transform_1, window_bounds = array<i64: 36, 128>}, {pipeline_mode = #tpu.pipeline_mode<synchronous>, transform_indices = @transform_2, window_bounds = array<i64: 1, 128>}, {pipeline_mode = #tpu.pipeline_mode<synchronous>, transform_indices = @transform_3, window_bounds = array<i64: 1, 128>}, {pipeline_mode = #tpu.pipeline_mode<synchronous>, transform_indices = @transform_4, window_bounds = array<i64: 144, 128>}]} {
    %c0_i32 = arith.constant 0 : i32
    %0 = arith.cmpi eq, %arg0, %c0_i32 : i32
    %1 = arith.extui %0 : i1 to i32
    %c0_i32_0 = arith.constant 0 : i32
    %2 = arith.cmpi ne, %1, %c0_i32_0 : i32
    scf.if %2 {
      %cst_20 = arith.constant 0.000000e+00 : f32
      %58 = vector.broadcast %cst_20 : f32 to vector<1x128xf32>
      %c0_21 = arith.constant 0 : index
      %c0_22 = arith.constant 0 : index
      %59 = vector.load %arg6[%c0_21, %c0_22] : memref<1x128xf32, #tpu.memory_space<vmem>>, vector<1x128xf32>
      tpu.vector_store %arg6[%c0_21, %c0_22], %58 {strides = array<i32>} : memref<1x128xf32, #tpu.memory_space<vmem>>, vector<1x128xf32>,
      %cst_23 = arith.constant 0.000000e+00 : f32
      %60 = vector.broadcast %cst_23 : f32 to vector<1x128xf32>
      %c0_24 = arith.constant 0 : index
      %c0_25 = arith.constant 0 : index
      %61 = vector.load %arg7[%c0_24, %c0_25] : memref<1x128xf32, #tpu.memory_space<vmem>>, vector<1x128xf32>
      tpu.vector_store %arg7[%c0_24, %c0_25], %60 {strides = array<i32>} : memref<1x128xf32, #tpu.memory_space<vmem>>, vector<1x128xf32>,
    } else {
    }
    %c0 = arith.constant 0 : index
    %c0_1 = arith.constant 0 : index
    %3 = vector.load %arg1[%c0, %c0_1] : memref<48x36xbf16, #tpu.memory_space<vmem>>, vector<48x36xbf16>
    %c0_2 = arith.constant 0 : index
    %c0_3 = arith.constant 0 : index
    %4 = vector.load %arg2[%c0_2, %c0_3] : memref<36x128xbf16, #tpu.memory_space<vmem>>, vector<36x128xbf16>
    %cst = arith.constant dense<0.000000e+00> : vector<48x128xf32>
    %5 = tpu.matmul %3, %4, %cst {dimension_numbers = #tpu.dot_dimension_numbers<[1], [0], [0], [1], [0, 0, 1, 1], [], []>} : vector<48x36xbf16>, vector<36x128xbf16>, vector<48x128xf32> -> vector<48x128xf32>
    %c48_i32 = arith.constant 48 : i32
    %6 = arith.muli %arg0, %c48_i32 : i32
    %7 = tpu.assume_multiple %6, 8 : i32
    %8 = arith.index_cast %7 : i32 to index
    %c0_4 = arith.constant 0 : index
    %9 = vector.load %arg5[%8, %c0_4] : memref<144x128xf32, #tpu.memory_space<vmem>>, vector<48x128xf32>
    tpu.vector_store %arg5[%8, %c0_4], %5 {strides = array<i32>} : memref<144x128xf32, #tpu.memory_space<vmem>>, vector<48x128xf32>,
    %c48_i32_5 = arith.constant 48 : i32
    %10 = arith.muli %arg0, %c48_i32_5 : i32
    %c128_i32 = arith.constant 128 : i32
    %11 = arith.subi %c128_i32, %10 : i32
    %c48_i32_6 = arith.constant 48 : i32
    %12 = arith.minsi %c48_i32_6, %11 : i32
    %13 = tpu.iota {dimensions = array<i32: 1>} : vector<8x48xi32>
    %14 = vector.broadcast %12 : i32 to vector<8x48xi32>
    %15 = arith.cmpi slt, %13, %14 : vector<8x48xi32>
    %16 = arith.extui %15 : vector<8x48xi1> to vector<8x48xi32>
    %17 = arith.sitofp %16 : vector<8x48xi32> to vector<8x48xf32>
    %18 = tpu.iota {dimensions = array<i32: 0>} : vector<48x1xi32>
    %19 = vector.broadcast %12 : i32 to vector<48x1xi32>
    %20 = arith.cmpi slt, %18, %19 : vector<48x1xi32>
    %21 = arith.extui %20 : vector<48x1xi1> to vector<48x1xi32>
    %22 = arith.sitofp %21 : vector<48x1xi32> to vector<48x1xf32>
    %23 = arith.sitofp %12 : i32 to f32
    %cst_7 = arith.constant dense<0.000000e+00> : vector<8x128xf32>
    %24 = tpu.matmul %17, %5, %cst_7 {dimension_numbers = #tpu.dot_dimension_numbers<[1], [0], [0], [1], [0, 0, 1, 1], [], []>} : vector<8x48xf32>, vector<48x128xf32>, vector<8x128xf32> -> vector<8x128xf32>
    %25 = vector.extract_strided_slice %24 {offsets = [0, 0], sizes = [1, 128], strides = [1, 1]} : vector<8x128xf32> to vector<1x128xf32>
    %cst_8 = arith.constant 1.000000e+00 : f32
    %26 = arith.divf %cst_8, %23 : f32
    %27 = vector.broadcast %26 : f32 to vector<1x128xf32>
    %28 = arith.mulf %25, %27 : vector<1x128xf32>
    %29 = vector.broadcast %28 : vector<1x128xf32> to vector<48x128xf32>
    %30 = arith.subf %5, %29 : vector<48x128xf32>
    %31 = vector.broadcast %22 : vector<48x1xf32> to vector<48x128xf32>
    %32 = arith.mulf %30, %31 : vector<48x128xf32>
    %33 = arith.mulf %32, %32 : vector<48x128xf32>
    %cst_9 = arith.constant dense<0.000000e+00> : vector<8x128xf32>
    %34 = tpu.matmul %17, %33, %cst_9 {dimension_numbers = #tpu.dot_dimension_numbers<[1], [0], [0], [1], [0, 0, 1, 1], [], []>} : vector<8x48xf32>, vector<48x128xf32>, vector<8x128xf32> -> vector<8x128xf32>
    %35 = vector.extract_strided_slice %34 {offsets = [0, 0], sizes = [1, 128], strides = [1, 1]} : vector<8x128xf32> to vector<1x128xf32>
    %c48_i32_10 = arith.constant 48 : i32
    %36 = arith.muli %arg0, %c48_i32_10 : i32
    %37 = arith.sitofp %36 : i32 to f32
    %38 = arith.addf %37, %23 : f32
    %c0_11 = arith.constant 0 : index
    %c0_12 = arith.constant 0 : index
    %39 = vector.load %arg6[%c0_11, %c0_12] : memref<1x128xf32, #tpu.memory_space<vmem>>, vector<1x128xf32>
    %40 = arith.subf %28, %39 : vector<1x128xf32>
    %41 = arith.divf %23, %38 : f32
    %42 = vector.broadcast %41 : f32 to vector<1x128xf32>
    %43 = arith.mulf %40, %42 : vector<1x128xf32>
    %44 = arith.addf %39, %43 : vector<1x128xf32>
    %c0_13 = arith.constant 0 : index
    %c0_14 = arith.constant 0 : index
    %45 = vector.load %arg6[%c0_13, %c0_14] : memref<1x128xf32, #tpu.memory_space<vmem>>, vector<1x128xf32>
    tpu.vector_store %arg6[%c0_13, %c0_14], %44 {strides = array<i32>} : memref<1x128xf32, #tpu.memory_space<vmem>>, vector<1x128xf32>,
    %c0_15 = arith.constant 0 : index
    %c0_16 = arith.constant 0 : index
    %46 = vector.load %arg7[%c0_15, %c0_16] : memref<1x128xf32, #tpu.memory_space<vmem>>, vector<1x128xf32>
    %47 = arith.addf %46, %35 : vector<1x128xf32>
    %48 = arith.mulf %40, %40 : vector<1x128xf32>
    %49 = arith.mulf %37, %23 : f32
    %50 = arith.divf %49, %38 : f32
    %51 = vector.broadcast %50 : f32 to vector<1x128xf32>
    %52 = arith.mulf %48, %51 : vector<1x128xf32>
    %53 = arith.addf %47, %52 : vector<1x128xf32>
    %c0_17 = arith.constant 0 : index
    %c0_18 = arith.constant 0 : index
    %54 = vector.load %arg7[%c0_17, %c0_18] : memref<1x128xf32, #tpu.memory_space<vmem>>, vector<1x128xf32>
    tpu.vector_store %arg7[%c0_17, %c0_18], %53 {strides = array<i32>} : memref<1x128xf32, #tpu.memory_space<vmem>>, vector<1x128xf32>,
    %c2_i32 = arith.constant 2 : i32
    %55 = arith.cmpi eq, %arg0, %c2_i32 : i32
    %56 = arith.extui %55 : i1 to i32
    %c0_i32_19 = arith.constant 0 : i32
    %57 = arith.cmpi ne, %56, %c0_i32_19 : i32
    scf.if %57 {
      %c0_20 = arith.constant 0 : index
      %c0_21 = arith.constant 0 : index
      %58 = vector.load %arg6[%c0_20, %c0_21] : memref<1x128xf32, #tpu.memory_space<vmem>>, vector<1x128xf32>
      %c0_22 = arith.constant 0 : index
      %c0_23 = arith.constant 0 : index
      %59 = vector.load %arg7[%c0_22, %c0_23] : memref<1x128xf32, #tpu.memory_space<vmem>>, vector<1x128xf32>
      %cst_24 = arith.constant 7.812500e-03 : f32
      %60 = vector.broadcast %cst_24 : f32 to vector<1x128xf32>
      %61 = arith.mulf %59, %60 : vector<1x128xf32>
      %cst_25 = arith.constant 9.99999974E-6 : f32
      %62 = vector.broadcast %cst_25 : f32 to vector<1x128xf32>
      %63 = arith.addf %61, %62 : vector<1x128xf32>
      %64 = math.rsqrt %63 : vector<1x128xf32>
      %c0_26 = arith.constant 0 : index
      %c0_27 = arith.constant 0 : index
      %65 = vector.load %arg3[%c0_26, %c0_27] : memref<1x128xf32, #tpu.memory_space<vmem>>, vector<1x128xf32>
      %66 = arith.mulf %65, %64 : vector<1x128xf32>
      %c0_28 = arith.constant 0 : index
      %c0_29 = arith.constant 0 : index
      %67 = vector.load %arg4[%c0_28, %c0_29] : memref<1x128xf32, #tpu.memory_space<vmem>>, vector<1x128xf32>
      %68 = arith.mulf %58, %66 : vector<1x128xf32>
      %69 = arith.subf %67, %68 : vector<1x128xf32>
      %c0_30 = arith.constant 0 : index
      %c0_31 = arith.constant 0 : index
      %70 = vector.load %arg5[%c0_30, %c0_31] : memref<144x128xf32, #tpu.memory_space<vmem>>, vector<144x128xf32>
      %71 = vector.broadcast %66 : vector<1x128xf32> to vector<144x128xf32>
      %72 = arith.mulf %70, %71 : vector<144x128xf32>
      %73 = vector.broadcast %69 : vector<1x128xf32> to vector<144x128xf32>
      %74 = arith.addf %72, %73 : vector<144x128xf32>
      %cst_32 = arith.constant 0.000000e+00 : f32
      %75 = vector.broadcast %cst_32 : f32 to vector<144x128xf32>
      %76 = arith.maximumf %74, %75 : vector<144x128xf32>
      %c0_33 = arith.constant 0 : index
      %c0_34 = arith.constant 0 : index
      %77 = vector.load %arg5[%c0_33, %c0_34] : memref<144x128xf32, #tpu.memory_space<vmem>>, vector<144x128xf32>
      tpu.vector_store %arg5[%c0_33, %c0_34], %76 {strides = array<i32>} : memref<144x128xf32, #tpu.memory_space<vmem>>, vector<144x128xf32>,
    } else {
    }
    return
  }
  func.func @transform_0(%arg0: i32) -> (i32, i32) {
    %c0_i32 = arith.constant 0 : i32
    %c0_i32_0 = arith.constant 0 : i32
    return %arg0, %c0_i32 : i32, i32
  }
  func.func @transform_1(%arg0: i32) -> (i32, i32) {
    %c0_i32 = arith.constant 0 : i32
    %c0_i32_0 = arith.constant 0 : i32
    %c0_i32_1 = arith.constant 0 : i32
    return %c0_i32, %c0_i32_0 : i32, i32
  }
  func.func @transform_2(%arg0: i32) -> (i32, i32) {
    %c0_i32 = arith.constant 0 : i32
    %c0_i32_0 = arith.constant 0 : i32
    %c0_i32_1 = arith.constant 0 : i32
    return %c0_i32, %c0_i32_0 : i32, i32
  }
  func.func @transform_3(%arg0: i32) -> (i32, i32) {
    %c0_i32 = arith.constant 0 : i32
    %c0_i32_0 = arith.constant 0 : i32
    %c0_i32_1 = arith.constant 0 : i32
    return %c0_i32, %c0_i32_0 : i32, i32
  }
  func.func @transform_4(%arg0: i32) -> (i32, i32) {
    %c0_i32 = arith.constant 0 : i32
    %c0_i32_0 = arith.constant 0 : i32
    %c0_i32_1 = arith.constant 0 : i32
    return %c0_i32, %c0_i32_0 : i32, i32
  }
}

module attributes {stable_mosaic.version = 11 : i64} {
  func.func @_conv_bn_fused_kernel(%arg0: i32, %arg1: memref<32x72xbf16, #tpu.memory_space<vmem>>, %arg2: memref<72x128xbf16, #tpu.memory_space<vmem>>, %arg3: memref<1x128xf32, #tpu.memory_space<vmem>>, %arg4: memref<1x128xf32, #tpu.memory_space<vmem>>, %arg5: memref<32x128xf32, #tpu.memory_space<vmem>>, %arg6: memref<1x128xf32, #tpu.memory_space<vmem>>, %arg7: memref<1x128xf32, #tpu.memory_space<vmem>>) attributes {dimension_semantics = [#tpu.dimension_semantics<arbitrary>], iteration_bounds = array<i64: 1>, scalar_prefetch = 0 : i64, scratch_operands = 2 : i64, tpu.core_type = #tpu.core_type<tc>, window_params = [{transform_indices = @transform_0, window_bounds = array<i64: 32, 72>}, {pipeline_mode = #tpu.pipeline_mode<synchronous>, transform_indices = @transform_1, window_bounds = array<i64: 72, 128>}, {pipeline_mode = #tpu.pipeline_mode<synchronous>, transform_indices = @transform_2, window_bounds = array<i64: 1, 128>}, {pipeline_mode = #tpu.pipeline_mode<synchronous>, transform_indices = @transform_3, window_bounds = array<i64: 1, 128>}, {pipeline_mode = #tpu.pipeline_mode<synchronous>, transform_indices = @transform_4, window_bounds = array<i64: 32, 128>}]} {
    %c0_i32 = arith.constant 0 : i32
    %0 = arith.cmpi eq, %arg0, %c0_i32 : i32
    %1 = arith.extui %0 : i1 to i32
    %c0_i32_0 = arith.constant 0 : i32
    %2 = arith.cmpi ne, %1, %c0_i32_0 : i32
    scf.if %2 {
      %cst_22 = arith.constant 0.000000e+00 : f32
      %58 = vector.broadcast %cst_22 : f32 to vector<1x128xf32>
      %c0_23 = arith.constant 0 : index
      %c0_24 = arith.constant 0 : index
      %59 = vector.load %arg6[%c0_23, %c0_24] : memref<1x128xf32, #tpu.memory_space<vmem>>, vector<1x128xf32>
      tpu.vector_store %arg6[%c0_23, %c0_24], %58 {strides = array<i32>} : memref<1x128xf32, #tpu.memory_space<vmem>>, vector<1x128xf32>,
      %cst_25 = arith.constant 0.000000e+00 : f32
      %60 = vector.broadcast %cst_25 : f32 to vector<1x128xf32>
      %c0_26 = arith.constant 0 : index
      %c0_27 = arith.constant 0 : index
      %61 = vector.load %arg7[%c0_26, %c0_27] : memref<1x128xf32, #tpu.memory_space<vmem>>, vector<1x128xf32>
      tpu.vector_store %arg7[%c0_26, %c0_27], %60 {strides = array<i32>} : memref<1x128xf32, #tpu.memory_space<vmem>>, vector<1x128xf32>,
    } else {
    }
    %c0 = arith.constant 0 : index
    %c0_1 = arith.constant 0 : index
    %3 = vector.load %arg1[%c0, %c0_1] : memref<32x72xbf16, #tpu.memory_space<vmem>>, vector<32x72xbf16>
    %c0_2 = arith.constant 0 : index
    %c0_3 = arith.constant 0 : index
    %4 = vector.load %arg2[%c0_2, %c0_3] : memref<72x128xbf16, #tpu.memory_space<vmem>>, vector<72x128xbf16>
    %cst = arith.constant dense<0.000000e+00> : vector<32x128xf32>
    %5 = tpu.matmul %3, %4, %cst {dimension_numbers = #tpu.dot_dimension_numbers<[1], [0], [0], [1], [0, 0, 1, 1], [], []>} : vector<32x72xbf16>, vector<72x128xbf16>, vector<32x128xf32> -> vector<32x128xf32>
    %c32_i32 = arith.constant 32 : i32
    %6 = arith.muli %arg0, %c32_i32 : i32
    %7 = tpu.assume_multiple %6, 8 : i32
    %8 = arith.index_cast %7 : i32 to index
    %c0_4 = arith.constant 0 : index
    %9 = vector.load %arg5[%8, %c0_4] : memref<32x128xf32, #tpu.memory_space<vmem>>, vector<32x128xf32>
    tpu.vector_store %arg5[%8, %c0_4], %5 {strides = array<i32>} : memref<32x128xf32, #tpu.memory_space<vmem>>, vector<32x128xf32>,
    %c32_i32_5 = arith.constant 32 : i32
    %10 = arith.muli %arg0, %c32_i32_5 : i32
    %c32_i32_6 = arith.constant 32 : i32
    %11 = arith.subi %c32_i32_6, %10 : i32
    %c32_i32_7 = arith.constant 32 : i32
    %12 = arith.minsi %c32_i32_7, %11 : i32
    %13 = tpu.iota {dimensions = array<i32: 1>} : vector<8x32xi32>
    %14 = vector.broadcast %12 : i32 to vector<8x32xi32>
    %15 = arith.cmpi slt, %13, %14 : vector<8x32xi32>
    %16 = arith.extui %15 : vector<8x32xi1> to vector<8x32xi32>
    %17 = arith.sitofp %16 : vector<8x32xi32> to vector<8x32xf32>
    %18 = tpu.iota {dimensions = array<i32: 0>} : vector<32x1xi32>
    %19 = vector.broadcast %12 : i32 to vector<32x1xi32>
    %20 = arith.cmpi slt, %18, %19 : vector<32x1xi32>
    %21 = arith.extui %20 : vector<32x1xi1> to vector<32x1xi32>
    %22 = arith.sitofp %21 : vector<32x1xi32> to vector<32x1xf32>
    %23 = arith.sitofp %12 : i32 to f32
    %cst_8 = arith.constant dense<0.000000e+00> : vector<8x128xf32>
    %24 = tpu.matmul %17, %5, %cst_8 {dimension_numbers = #tpu.dot_dimension_numbers<[1], [0], [0], [1], [0, 0, 1, 1], [], []>} : vector<8x32xf32>, vector<32x128xf32>, vector<8x128xf32> -> vector<8x128xf32>
    %25 = vector.extract_strided_slice %24 {offsets = [0, 0], sizes = [1, 128], strides = [1, 1]} : vector<8x128xf32> to vector<1x128xf32>
    %cst_9 = arith.constant 1.000000e+00 : f32
    %26 = arith.divf %cst_9, %23 : f32
    %27 = vector.broadcast %26 : f32 to vector<1x128xf32>
    %28 = arith.mulf %25, %27 : vector<1x128xf32>
    %29 = vector.broadcast %28 : vector<1x128xf32> to vector<32x128xf32>
    %30 = arith.subf %5, %29 : vector<32x128xf32>
    %31 = vector.broadcast %22 : vector<32x1xf32> to vector<32x128xf32>
    %32 = arith.mulf %30, %31 : vector<32x128xf32>
    %33 = arith.mulf %32, %32 : vector<32x128xf32>
    %cst_10 = arith.constant dense<0.000000e+00> : vector<8x128xf32>
    %34 = tpu.matmul %17, %33, %cst_10 {dimension_numbers = #tpu.dot_dimension_numbers<[1], [0], [0], [1], [0, 0, 1, 1], [], []>} : vector<8x32xf32>, vector<32x128xf32>, vector<8x128xf32> -> vector<8x128xf32>
    %35 = vector.extract_strided_slice %34 {offsets = [0, 0], sizes = [1, 128], strides = [1, 1]} : vector<8x128xf32> to vector<1x128xf32>
    %c32_i32_11 = arith.constant 32 : i32
    %36 = arith.muli %arg0, %c32_i32_11 : i32
    %37 = arith.sitofp %36 : i32 to f32
    %38 = arith.addf %37, %23 : f32
    %c0_12 = arith.constant 0 : index
    %c0_13 = arith.constant 0 : index
    %39 = vector.load %arg6[%c0_12, %c0_13] : memref<1x128xf32, #tpu.memory_space<vmem>>, vector<1x128xf32>
    %40 = arith.subf %28, %39 : vector<1x128xf32>
    %41 = arith.divf %23, %38 : f32
    %42 = vector.broadcast %41 : f32 to vector<1x128xf32>
    %43 = arith.mulf %40, %42 : vector<1x128xf32>
    %44 = arith.addf %39, %43 : vector<1x128xf32>
    %c0_14 = arith.constant 0 : index
    %c0_15 = arith.constant 0 : index
    %45 = vector.load %arg6[%c0_14, %c0_15] : memref<1x128xf32, #tpu.memory_space<vmem>>, vector<1x128xf32>
    tpu.vector_store %arg6[%c0_14, %c0_15], %44 {strides = array<i32>} : memref<1x128xf32, #tpu.memory_space<vmem>>, vector<1x128xf32>,
    %c0_16 = arith.constant 0 : index
    %c0_17 = arith.constant 0 : index
    %46 = vector.load %arg7[%c0_16, %c0_17] : memref<1x128xf32, #tpu.memory_space<vmem>>, vector<1x128xf32>
    %47 = arith.addf %46, %35 : vector<1x128xf32>
    %48 = arith.mulf %40, %40 : vector<1x128xf32>
    %49 = arith.mulf %37, %23 : f32
    %50 = arith.divf %49, %38 : f32
    %51 = vector.broadcast %50 : f32 to vector<1x128xf32>
    %52 = arith.mulf %48, %51 : vector<1x128xf32>
    %53 = arith.addf %47, %52 : vector<1x128xf32>
    %c0_18 = arith.constant 0 : index
    %c0_19 = arith.constant 0 : index
    %54 = vector.load %arg7[%c0_18, %c0_19] : memref<1x128xf32, #tpu.memory_space<vmem>>, vector<1x128xf32>
    tpu.vector_store %arg7[%c0_18, %c0_19], %53 {strides = array<i32>} : memref<1x128xf32, #tpu.memory_space<vmem>>, vector<1x128xf32>,
    %c0_i32_20 = arith.constant 0 : i32
    %55 = arith.cmpi eq, %arg0, %c0_i32_20 : i32
    %56 = arith.extui %55 : i1 to i32
    %c0_i32_21 = arith.constant 0 : i32
    %57 = arith.cmpi ne, %56, %c0_i32_21 : i32
    scf.if %57 {
      %c0_22 = arith.constant 0 : index
      %c0_23 = arith.constant 0 : index
      %58 = vector.load %arg6[%c0_22, %c0_23] : memref<1x128xf32, #tpu.memory_space<vmem>>, vector<1x128xf32>
      %c0_24 = arith.constant 0 : index
      %c0_25 = arith.constant 0 : index
      %59 = vector.load %arg7[%c0_24, %c0_25] : memref<1x128xf32, #tpu.memory_space<vmem>>, vector<1x128xf32>
      %cst_26 = arith.constant 3.125000e-02 : f32
      %60 = vector.broadcast %cst_26 : f32 to vector<1x128xf32>
      %61 = arith.mulf %59, %60 : vector<1x128xf32>
      %cst_27 = arith.constant 9.99999974E-6 : f32
      %62 = vector.broadcast %cst_27 : f32 to vector<1x128xf32>
      %63 = arith.addf %61, %62 : vector<1x128xf32>
      %64 = math.rsqrt %63 : vector<1x128xf32>
      %c0_28 = arith.constant 0 : index
      %c0_29 = arith.constant 0 : index
      %65 = vector.load %arg3[%c0_28, %c0_29] : memref<1x128xf32, #tpu.memory_space<vmem>>, vector<1x128xf32>
      %66 = arith.mulf %65, %64 : vector<1x128xf32>
      %c0_30 = arith.constant 0 : index
      %c0_31 = arith.constant 0 : index
      %67 = vector.load %arg4[%c0_30, %c0_31] : memref<1x128xf32, #tpu.memory_space<vmem>>, vector<1x128xf32>
      %68 = arith.mulf %58, %66 : vector<1x128xf32>
      %69 = arith.subf %67, %68 : vector<1x128xf32>
      %c0_32 = arith.constant 0 : index
      %c0_33 = arith.constant 0 : index
      %70 = vector.load %arg5[%c0_32, %c0_33] : memref<32x128xf32, #tpu.memory_space<vmem>>, vector<32x128xf32>
      %71 = vector.broadcast %66 : vector<1x128xf32> to vector<32x128xf32>
      %72 = arith.mulf %70, %71 : vector<32x128xf32>
      %73 = vector.broadcast %69 : vector<1x128xf32> to vector<32x128xf32>
      %74 = arith.addf %72, %73 : vector<32x128xf32>
      %c0_34 = arith.constant 0 : index
      %c0_35 = arith.constant 0 : index
      %75 = vector.load %arg5[%c0_34, %c0_35] : memref<32x128xf32, #tpu.memory_space<vmem>>, vector<32x128xf32>
      tpu.vector_store %arg5[%c0_34, %c0_35], %74 {strides = array<i32>} : memref<32x128xf32, #tpu.memory_space<vmem>>, vector<32x128xf32>,
    } else {
    }
    return
  }
  func.func @transform_0(%arg0: i32) -> (i32, i32) {
    %c0_i32 = arith.constant 0 : i32
    %c0_i32_0 = arith.constant 0 : i32
    return %arg0, %c0_i32 : i32, i32
  }
  func.func @transform_1(%arg0: i32) -> (i32, i32) {
    %c0_i32 = arith.constant 0 : i32
    %c0_i32_0 = arith.constant 0 : i32
    %c0_i32_1 = arith.constant 0 : i32
    return %c0_i32, %c0_i32_0 : i32, i32
  }
  func.func @transform_2(%arg0: i32) -> (i32, i32) {
    %c0_i32 = arith.constant 0 : i32
    %c0_i32_0 = arith.constant 0 : i32
    %c0_i32_1 = arith.constant 0 : i32
    return %c0_i32, %c0_i32_0 : i32, i32
  }
  func.func @transform_3(%arg0: i32) -> (i32, i32) {
    %c0_i32 = arith.constant 0 : i32
    %c0_i32_0 = arith.constant 0 : i32
    %c0_i32_1 = arith.constant 0 : i32
    return %c0_i32, %c0_i32_0 : i32, i32
  }
  func.func @transform_4(%arg0: i32) -> (i32, i32) {
    %c0_i32 = arith.constant 0 : i32
    %c0_i32_0 = arith.constant 0 : i32
    %c0_i32_1 = arith.constant 0 : i32
    return %c0_i32, %c0_i32_0 : i32, i32
  }
}

</mosaic_0001>

<llo_original>
// kernel: fwd.2
$region0: #{fwd.2}
  #allocation0 [shape = 'u32[]', space=smem, size = 0x4, offset = 0x4, fixed_abs, tag = 'smem constant byte address 0x4 - core index']
  #allocation1 [shape = 'u32[144,128]{1,0:T(1,128)}', space=vmem, size = 0x12000, scoped, tag = 'internal scratch']
  #allocation2 [shape = 'f32[1,128]{1,0:T(1,128)}', space=vmem, size = 0x200, scoped, tag = 'scratch operand']
  #allocation3 [shape = 'f32[1,128]{1,0:T(1,128)}', space=vmem, size = 0x200, scoped, tag = 'scratch operand']
  %s0 = inlined_call_operand.vmem [shape: bf16[144,36], index: 0, kind: input, shape index: {}]
  %s1 = inlined_call_operand.vmem [shape: bf16[36,128], index: 1, kind: input, shape index: {}]
  %s2 = inlined_call_operand.vmem [shape: f32[1,128], index: 2, kind: input, shape index: {}]
  %s3 = inlined_call_operand.vmem [shape: f32[1,128], index: 3, kind: input, shape index: {}]
  %s4 = inlined_call_operand.vmem [shape: f32[144,128], index: 4, kind: output, shape index: {}]
  %s5 = sld [smem:[#allocation0]]
  $region57: #{fwd.2} parent=0
    _
  %s7 = ssub.s32 1, %s5
  %s8 = scalar_select 0, %s7, %s5
  loop: start=0, step=1, limit=5
  $region2: #{fwd.2} parent=0 // loop_pre_header
    _
  $region3: #{fwd.2} parent=0 // loop_header
    %s10 = sphi 0, %s14
    %p11 = scmp.ge.s32.totalorder %s10, 5
    %s20 = sphi 0, %s22
    %s23 = sphi 0, %s20
    %s24 = sphi 0, %s23
    %s40 = sphi 0, %s24
    %s44 = sphi 0, %s44
    %s46 = sphi 0, %s44
    %s47 = sphi 0, %s46
    %s61 = sphi 0, %s47
    %s65 = sphi 0, %s65
    %s67 = sphi 0, %s65
    %s68 = sphi 0, %s67
    %s82 = sphi 0, %s68
    %s86 = sphi 0, %s86
    %s88 = sphi 0, %s86
    %s89 = sphi 0, %s88
    %s103 = sphi 0, %s89
    %s107 = sphi 0, %s107
    %s109 = sphi 0, %s107
    %s110 = sphi 0, %s109
    %s124 = sphi 0, %s110
  $region4: #{fwd.2} parent=0 // loop_header_branch
    %13 = sbr.rel (%p11) target = $region8
  $region5: #{fwd.2} parent=0 // loop_body
    %s15 = ssub.s32 %s10, 1
    %s16 = ssub.s32 %s10, 2
    %s17 = sadd.s32 %s10, 1
    %s18 = ssub.s32 %s10, %s17
    %p19 = scmp.eq.s32.totalorder %s18, 0
    %s21 = sadd.s32 %s20, 1
    %s22 = scalar_select %p19, %s20, %s21
    %p25 = pneg %p19
    %p26 = scmp.eq.s32.totalorder %s10, 2
    %p27 = por %p25, %p26
    %p28 = scmp.ne.s32.totalorder %s20, %s23
    %p29 = scmp.eq.s32.totalorder %s10, 0
    %p30 = por %p28, %p29
    %p31 = scmp.ne.s32.totalorder %s20, %s23
    %p32 = scmp.eq.s32.totalorder %s15, 2
    %p33 = por %p31, %p32
    %p34 = scmp.ne.s32.totalorder %s23, %s24
    %p35 = scmp.eq.s32.totalorder %s15, 0
    %p36 = por %p34, %p35
    %p37 = scmp.ne.s32.totalorder %s23, %s24
    %p38 = scmp.eq.s32.totalorder %s16, 2
    %p39 = por %p37, %p38
    %p41 = scmp.ne.s32.totalorder %s24, %s40
    %p42 = scmp.eq.s32.totalorder %s16, 0
    %p43 = por %p41, %p42
    %s45 = sadd.s32 %s44, 1
    %p48 = scmp.eq.s32.totalorder %s10, 2
    %p49 = scmp.ne.s32.totalorder %s44, %s46
    %p50 = scmp.eq.s32.totalorder %s10, 0
    %p51 = por %p49, %p50
    %p52 = scmp.ne.s32.totalorder %s44, %s46
    %p53 = scmp.eq.s32.totalorder %s15, 2
    %p54 = por %p52, %p53
    %p55 = scmp.ne.s32.totalorder %s46, %s47
    %p56 = scmp.eq.s32.totalorder %s15, 0
    %p57 = por %p55, %p56
    %p58 = scmp.ne.s32.totalorder %s46, %s47
    %p59 = scmp.eq.s32.totalorder %s16, 2
    %p60 = por %p58, %p59
    %p62 = scmp.ne.s32.totalorder %s47, %s61
    %p63 = scmp.eq.s32.totalorder %s16, 0
    %p64 = por %p62, %p63
    %s66 = sadd.s32 %s65, 1
    %p69 = scmp.eq.s32.totalorder %s10, 2
    %p70 = scmp.ne.s32.totalorder %s65, %s67
    %p71 = scmp.eq.s32.totalorder %s10, 0
    %p72 = por %p70, %p71
    %p73 = scmp.ne.s32.totalorder %s65, %s67
    %p74 = scmp.eq.s32.totalorder %s15, 2
    %p75 = por %p73, %p74
    %p76 = scmp.ne.s32.totalorder %s67, %s68
    %p77 = scmp.eq.s32.totalorder %s15, 0
    %p78 = por %p76, %p77
    %p79 = scmp.ne.s32.totalorder %s67, %s68
    %p80 = scmp.eq.s32.totalorder %s16, 2
    %p81 = por %p79, %p80
    %p83 = scmp.ne.s32.totalorder %s68, %s82
    %p84 = scmp.eq.s32.totalorder %s16, 0
    %p85 = por %p83, %p84
    %s87 = sadd.s32 %s86, 1
    %p90 = scmp.eq.s32.totalorder %s10, 2
    %p91 = scmp.ne.s32.totalorder %s86, %s88
    %p92 = scmp.eq.s32.totalorder %s10, 0
    %p93 = por %p91, %p92
    %p94 = scmp.ne.s32.totalorder %s86, %s88
    %p95 = scmp.eq.s32.totalorder %s15, 2
    %p96 = por %p94, %p95
    %p97 = scmp.ne.s32.totalorder %s88, %s89
    %p98 = scmp.eq.s32.totalorder %s15, 0
    %p99 = por %p97, %p98
    %p100 = scmp.ne.s32.totalorder %s88, %s89
    %p101 = scmp.eq.s32.totalorder %s16, 2
    %p102 = por %p100, %p101
    %p104 = scmp.ne.s32.totalorder %s89, %s103
    %p105 = scmp.eq.s32.totalorder %s16, 0
    %p106 = por %p104, %p105
    %s108 = sadd.s32 %s107, 1
    %p111 = scmp.eq.s32.totalorder %s10, 2
    %p112 = scmp.ne.s32.totalorder %s107, %s109
    %p113 = scmp.eq.s32.totalorder %s10, 0
    %p114 = por %p112, %p113
    %p115 = scmp.ne.s32.totalorder %s107, %s109
    %p116 = scmp.eq.s32.totalorder %s15, 2
    %p117 = por %p115, %p116
    %p118 = scmp.ne.s32.totalorder %s109, %s110
    %p119 = scmp.eq.s32.totalorder %s15, 0
    %p120 = por %p118, %p119
    %p121 = scmp.ne.s32.totalorder %s109, %s110
    %p122 = scmp.eq.s32.totalorder %s16, 2
    %p123 = por %p121, %p122
    %p125 = scmp.ne.s32.totalorder %s110, %s124
    %p126 = scmp.eq.s32.totalorder %s16, 0
    %p127 = por %p125, %p126
    %p128 = scmp.le.s32.totalorder 1, %s10
    %p129 = scmp.lt.s32.totalorder %s10, 4
    %p130 = pnand %p128, %p129
    %p131 = pneg %p130
    // Predicated region
    $region9: #{fwd.2} parent=5 // pred_check
      _
    $region10: #{fwd.2} parent=5 // pred_check_branch
      %133 = sbr.rel (%p130) target = $region12
    $region11: #{fwd.2} parent=5 // pred_region
      %s134 = ssub.s32 %s10, 1
      // Predicated region
      $region13: #{fwd.2} parent=11 // pred_check
        %p135 = pneg %p57
      $region14: #{fwd.2} parent=11 // pred_check_branch
        %137 = sbr.rel (%p135) target = $region16
      $region15: #{fwd.2} parent=11 // pred_region
        _
      $region16: #{fwd.2} parent=11 // pred_fallthru
        _
      // Predicated region
      $region17: #{fwd.2} parent=11 // pred_check
        %p138 = pneg %p78
      $region18: #{fwd.2} parent=11 // pred_check_branch
        %140 = sbr.rel (%p138) target = $region20
      $region19: #{fwd.2} parent=11 // pred_region
        _
      $region20: #{fwd.2} parent=11 // pred_fallthru
        _
      // Predicated region
      $region21: #{fwd.2} parent=11 // pred_check
        %p141 = pneg %p99
      $region22: #{fwd.2} parent=11 // pred_check_branch
        %143 = sbr.rel (%p141) target = $region24
      $region23: #{fwd.2} parent=11 // pred_region
        _
      $region24: #{fwd.2} parent=11 // pred_fallthru
        _
    $region12: #{fwd.2} parent=5 // pred_fallthru
      _
    %p144 = scmp.lt.s32.totalorder %s10, 3
    // Predicated region
    $region25: #{fwd.2} parent=5 // pred_check
      %p145 = pneg %p144
    $region26: #{fwd.2} parent=5 // pred_check_branch
      %147 = sbr.rel (%p145) target = $region28
    $region27: #{fwd.2} parent=5 // pred_region
      // Predicated region
      $region29: #{fwd.2} parent=27 // pred_check
        %p148 = pneg %p30
      $region30: #{fwd.2} parent=27 // pred_check_branch
        %150 = sbr.rel (%p148) target = $region32
      $region31: #{fwd.2} parent=27 // pred_region
        %s151 = smul.u32 6, %s10
        %p152 = scmp.lt.s32.totalorder %s151, 17
        %s153 = scalar_select %p152, %s151, 17
        %s154 = smul.addr %s153, 4
        %s155 = scalar_lea.vmem %s0, %s154
        %s156 = smul.u32 6, %s10
      $region32: #{fwd.2} parent=27 // pred_fallthru
        _
    $region28: #{fwd.2} parent=5 // pred_fallthru
      _
    %p157 = scmp.le.s32.totalorder 1, %s10
    %p158 = scmp.lt.s32.totalorder %s10, 4
    %p159 = pnand %p157, %p158
    %p160 = pneg %p159
    // Predicated region
    $region33: #{fwd.2} parent=5 // pred_check
      _
    $region34: #{fwd.2} parent=5 // pred_check_branch
      %162 = sbr.rel (%p159) target = $region36
    $region35: #{fwd.2} parent=5 // pred_region
      %s163 = ssub.s32 %s10, 1
      %s164 = smul.u32 6, %s15
      %p165 = scmp.lt.s32.totalorder %s164, 17
      %s166 = scalar_select %p165, %s164, 17
      %s167 = smul.addr %s166, 4
      %s168 = scalar_lea.vmem %s0, %s167
      %p169 = pneg %p36
      %p170 = pneg %p33
      %p171 = pneg %p57
      %p172 = pneg %p54
      %p173 = pneg %p78
      %p174 = pneg %p75
      %p175 = pneg %p99
      %p176 = pneg %p96
      %p177 = pneg %p120
      %p178 = pneg %p117
      %s179 = smul.u32 6, %s15
      %p180 = scmp.lt.s32.totalorder %s179, 17
      %s181 = scalar_select %p180, %s179, 17
      %s182 = smul.addr %s181, 4
      %s183 = scalar_lea.vmem %s0, %s182
      %s184 = smul.u32 6, %s15
      %p186 = scmp.eq.s32.totalorder %s15, 0
      // Predicated region
      $region37: #{fwd.2} parent=35 // pred_check
        %p187 = pneg %p186
      $region38: #{fwd.2} parent=35 // pred_check_branch
        %189 = sbr.rel (%p187) target = $region40
      $region39: #{fwd.2} parent=35 // pred_region
        %190 = vst [vmem:[#allocation2] sm:$0x1] 0.0
        %191 = vst [vmem:[#allocation3] sm:$0x1] 0.0
      $region40: #{fwd.2} parent=35 // pred_fallthru
        _
      %v192 = vld [vmem:[%s183] sm:$0xf]
      %v193 = vld [vmem:[%s183 + $0x4] sm:$0xf]
      %v194 = vld [vmem:[%s183 + $0x8] sm:$0xf]
      %v195 = vld [vmem:[%s183 + $0xc] sm:$0xf]
      %v196 = vld [vmem:[%s183 + $0x10] sm:$0xf]
      %v197 = vld [vmem:[%s183 + $0x14] sm:$0xf]
      %v198 = vld [vmem:[%s1] sm:$0xf]
      %v199 = vld [vmem:[%s1 + $0x4] sm:$0xf]
      %v200 = vld [vmem:[%s1 + $0x8] sm:$0xf]
      %v201 = vld [vmem:[%s1 + $0xc] sm:$0xf]
      %v202 = vld [vmem:[%s1 + $0x10] sm:$0x3]
      %v209 = vunpack.c.l.b16 %v192
      %v210 = vunpack.c.l.b16 %v193
      %v211 = vunpack.c.l.b16 %v194
      %v212 = vunpack.c.l.b16 %v195
      %v213 = vunpack.c.l.b16 %v196
      %v214 = vunpack.c.l.b16 %v197
      %v215 = vpack.c.b16 %v210, %v209
      %v216 = vpack.c.b16 %v212, %v211
      %v217 = vpack.c.b16 %v214, %v213
      %v223 = vunpack.c.l.b16 %v198
      %v224 = vunpack.c.l.b16 %v199
      %v225 = vunpack.c.l.b16 %v200
      %v226 = vunpack.c.l.b16 %v201
      %v227 = vunpack.c.l.b16 %v202
      %v228 = vpack.c.b16 %v224, %v223
      %v229 = vpack.c.b16 %v226, %v225
      %v230 = vpack.c.b16 %v227, %v227
      %vm233 = vcmask 293888
      %v235 = vsel %vm233, %v215, 0
      %v238 = vsel %vm233, %v216, 0
      %v241 = vsel %vm233, %v217, 0
      %vm243 = vcmask 1041408
      %v245 = vsel %vm243, %v230, 0
      %247 = vmatprep.subr.bf16.mxu0 0
      %248 = vmatpush1.bf16.msra.mxu0 0
      %249 = vmatprep.subr.bf16.mxu0 0
      %250 = vmatpush1.bf16.msra.mxu0 0
      %251 = vmatprep.subr.bf16.mxu0 0
      %252 = vmatpush1.bf16.msra.mxu0 0
      %253 = vmatprep.subr.bf16.mxu0 0
      %254 = vmatpush1.bf16.msra.mxu0 0
      %255 = vmatprep.subr.bf16.mxu0 0
      %256 = vmatpush1.bf16.msra.mxu0 0
      %257 = vmatprep.subr.bf16.mxu0 0
      %258 = vmatpush1.bf16.msra.mxu0 %v245
      %259 = vmatprep.subr.bf16.mxu0 0
      %260 = vmatpush1.bf16.msra.mxu0 %v229
      %261 = vmatprep.subr.bf16.mxu0 0
      %262 = vmatpush1.bf16.msra.mxu0 %v228
      %263 = vmatprep.subr.bf16.mxu0 0
      %264 = vmatpush2.bf16.msra.mxu0 0
      %265 = vmatprep.subr.bf16.mxu0 0
      %266 = vmatpush2.bf16.msra.mxu0 0
      %267 = vmatprep.subr.bf16.mxu0 0
      %268 = vmatpush2.bf16.msra.mxu0 0
      %269 = vmatprep.subr.bf16.mxu0 0
      %270 = vmatpush2.bf16.msra.mxu0 0
      %271 = vmatprep.subr.bf16.mxu0 0
      %272 = vmatpush2.bf16.msra.mxu0 0
      %273 = vmatprep.subr.bf16.mxu0 0
      %274 = vmatpush2.bf16.msra.mxu0 0
      %275 = vmatprep.subr.bf16.mxu0 0
      %276 = vmatpush2.bf16.msra.mxu0 0
      %277 = vmatprep.subr.bf16.mxu0 0
      %278 = vmatpush2.bf16.msra.mxu0 0
      %279 = vmatprep.mubr.bf16.mxu0 0
      %280 = vmatmul.mubr.bf16.gmra.mxu0 %v235
      %v281 = vpop.f32.mrf.mxu0
      %v282 = vadd.f32 0.0, %v281
      %v283 = vpop.f32.mrf.mxu0
      %v284 = vpop.f32.mrf.mxu0
      %v285 = vadd.f32 0.0, %v284
      %v286 = vpop.f32.mrf.mxu0
      %287 = vmatprep.mubr.bf16.mxu0 0
      %288 = vmatmul.mubr.bf16.gmra.mxu0 %v238
      %v289 = vpop.f32.mrf.mxu0
      %v290 = vadd.f32 0.0, %v289
      %v291 = vpop.f32.mrf.mxu0
      %v292 = vpop.f32.mrf.mxu0
      %v293 = vadd.f32 0.0, %v292
      %v294 = vpop.f32.mrf.mxu0
      %295 = vmatprep.mubr.bf16.mxu0 0
      %296 = vmatmul.mubr.bf16.gmra.mxu0 %v241
      %v297 = vpop.f32.mrf.mxu0
      %v298 = vadd.f32 0.0, %v297
      %v299 = vpop.f32.mrf.mxu0
      %v300 = vpop.f32.mrf.mxu0
      %v301 = vadd.f32 0.0, %v300
      %v302 = vpop.f32.mrf.mxu0
      %303 = vdwg.mxu0
      %s304 = smul.u32 %s15, 48
      %s305 = scalar_lea.vmem %s4, %s304
      %306 = vst [vmem:[%s305] sm:$0xff] %v282
      %307 = vst [vmem:[%s305 + $0x8] sm:$0xff] %v285
      %308 = vst [vmem:[%s305 + $0x10] sm:$0xff] %v290
      %309 = vst [vmem:[%s305 + $0x18] sm:$0xff] %v293
      %310 = vst [vmem:[%s305 + $0x20] sm:$0xff] %v298
      %311 = vst [vmem:[%s305 + $0x28] sm:$0xff] %v301
      %s312 = ssub.s32 128, %s304
      %p313 = scmp.lt.s32.totalorder %s312, 48
      %s314 = scalar_select %p313, %s312, 48
      %v315 = vlaneseq
      %v316 = vand.u32 %v315, 127
      %v317 = vstv %s314
      %vm318 = vcmp.lt.s32.totalorder %v316, %v317
      %v319 = vsel %vm318, 1, 0
      %v320 = vcvt.s32.f32 %v319
      %v321 = vlaneseq
      %v322 = vshrl.u32 %v321, 7
      %v323 = vadd.s32 %v322, 8
      %v324 = vadd.s32 %v322, 16
      %v325 = vadd.s32 %v322, 24
      %v326 = vadd.s32 %v322, 32
      %v327 = vadd.s32 %v322, 40
      %vm328 = vcmp.lt.s32.totalorder %v322, %v317
      %vm329 = vcmp.lt.s32.totalorder %v323, %v317
      %vm330 = vcmp.lt.s32.totalorder %v324, %v317
      %vm331 = vcmp.lt.s32.totalorder %v325, %v317
      %vm332 = vcmp.lt.s32.totalorder %v326, %v317
      %vm333 = vcmp.lt.s32.totalorder %v327, %v317
      %v334 = vsel %vm328, 1, 0
      %v335 = vsel %vm329, 1, 0
      %v336 = vsel %vm330, 1, 0
      %v337 = vsel %vm331, 1, 0
      %v338 = vsel %vm332, 1, 0
      %v339 = vsel %vm333, 1, 0
      %v340 = vcvt.s32.f32 %v334
      %v341 = vcvt.s32.f32 %v335
      %v342 = vcvt.s32.f32 %v336
      %v343 = vcvt.s32.f32 %v337
      %v344 = vcvt.s32.f32 %v338
      %v345 = vcvt.s32.f32 %v339
      %s346 = scvt.s32.f32 %s314
      %vm347 = vcmask 392192
      %v349 = vsel %vm347, %v320, 0
      %351 = vmatprep.subr.mxu0 0.0
      %352 = vmatpush1.msra.mxu0 0.0
      %353 = vmatprep.subr.mxu0 0.0
      %354 = vmatpush1.msra.mxu0 0.0
      %355 = vmatprep.subr.mxu0 0.0
      %356 = vmatpush1.msra.mxu0 0.0
      %357 = vmatprep.subr.mxu0 0.0
      %358 = vmatpush1.msra.mxu0 0.0
      %359 = vmatprep.subr.mxu0 0.0
      %360 = vmatpush1.msra.mxu0 0.0
      %361 = vmatprep.subr.mxu0 0.0
      %362 = vmatpush1.msra.mxu0 0.0
      %363 = vmatprep.subr.mxu0 0.0
      %364 = vmatpush1.msra.mxu0 0.0
      %365 = vmatprep.subr.mxu0 0.0
      %366 = vmatpush1.msra.mxu0 0.0
      %367 = vmatprep.subr.mxu0 0.0
      %368 = vmatpush1.msra.mxu0 0.0
      %369 = vmatprep.subr.mxu0 0.0
      %370 = vmatpush1.msra.mxu0 0.0
      %371 = vmatprep.subr.mxu0 0.0
      %372 = vmatpush1.msra.mxu0 %v301
      %373 = vmatprep.subr.mxu0 0.0
      %374 = vmatpush1.msra.mxu0 %v298
      %375 = vmatprep.subr.mxu0 0.0
      %376 = vmatpush1.msra.mxu0 %v293
      %377 = vmatprep.subr.mxu0 0.0
      %378 = vmatpush1.msra.mxu0 %v290
      %379 = vmatprep.subr.mxu0 0.0
      %380 = vmatpush1.msra.mxu0 %v285
      %381 = vmatprep.subr.mxu0 0.0
      %382 = vmatpush1.msra.mxu0 %v282
      %383 = vmatprep.subr.mxu0 0.0
      %384 = vmatpush2.msra.mxu0 0.0
      %385 = vmatprep.subr.mxu0 0.0
      %386 = vmatpush2.msra.mxu0 0.0
      %387 = vmatprep.subr.mxu0 0.0
      %388 = vmatpush2.msra.mxu0 0.0
      %389 = vmatprep.subr.mxu0 0.0
      %390 = vmatpush2.msra.mxu0 0.0
      %391 = vmatprep.subr.mxu0 0.0
      %392 = vmatpush2.msra.mxu0 0.0
      %393 = vmatprep.subr.mxu0 0.0
      %394 = vmatpush2.msra.mxu0 0.0
      %395 = vmatprep.subr.mxu0 0.0
      %396 = vmatpush2.msra.mxu0 0.0
      %397 = vmatprep.subr.mxu0 0.0
      %398 = vmatpush2.msra.mxu0 0.0
      %399 = vmatprep.subr.mxu0 0.0
      %400 = vmatpush2.msra.mxu0 0.0
      %401 = vmatprep.subr.mxu0 0.0
      %402 = vmatpush2.msra.mxu0 0.0
      %403 = vmatprep.subr.mxu0 0.0
      %404 = vmatpush2.msra.mxu0 0.0
      %405 = vmatprep.subr.mxu0 0.0
      %406 = vmatpush2.msra.mxu0 0.0
      %407 = vmatprep.subr.mxu0 0.0
      %408 = vmatpush2.msra.mxu0 0.0
      %409 = vmatprep.subr.mxu0 0.0
      %410 = vmatpush2.msra.mxu0 0.0
      %411 = vmatprep.subr.mxu0 0.0
      %412 = vmatpush2.msra.mxu0 0.0
      %413 = vmatprep.subr.mxu0 0.0
      %414 = vmatpush2.msra.mxu0 0.0
      %415 = vmatprep.mubr.f32.mxu0 0.0
      %416 = vmatmul.mubr.f32.gmra.mxu0 %v349
      %v417 = vpop.f32.mrf.mxu0
      %v418 = vadd.f32 0.0, %v417
      %v419 = vpop.f32.mrf.mxu0
      %420 = vdwg.mxu0
      %v421 = vstv %s346
      %v422 = vrcp.pop %v421
      %s423 = vtos %v422
      %v424 = vstv %s423
      %v425 = vmul.f32 %v418, %v424
      %v426 = vlaneseq
      %v427 = vshrl.u32 %v426, 7
      %v428 = vsub.s32 0, %v427
      %v429 = vrot.slane %v425, %v428
      %v430 = vsub.f32 %v282, %v429
      %v431 = vsub.f32 %v285, %v429
      %v432 = vsub.f32 %v290, %v429
      %v433 = vsub.f32 %v293, %v429
      %v434 = vsub.f32 %v298, %v429
      %v435 = vsub.f32 %v301, %v429
      %v436 = vmul.f32 %v430, %v340
      %v437 = vmul.f32 %v431, %v341
      %v438 = vmul.f32 %v432, %v342
      %v439 = vmul.f32 %v433, %v343
      %v440 = vmul.f32 %v434, %v344
      %v441 = vmul.f32 %v435, %v345
      %v442 = vmul.f32 %v436, %v436
      %v443 = vmul.f32 %v437, %v437
      %v444 = vmul.f32 %v438, %v438
      %v445 = vmul.f32 %v439, %v439
      %v446 = vmul.f32 %v440, %v440
      %v447 = vmul.f32 %v441, %v441
      %448 = vmatprep.subr.mxu0 0.0
      %449 = vmatpush1.msra.mxu0 0.0
      %450 = vmatprep.subr.mxu0 0.0
      %451 = vmatpush1.msra.mxu0 0.0
      %452 = vmatprep.subr.mxu0 0.0
      %453 = vmatpush1.msra.mxu0 0.0
      %454 = vmatprep.subr.mxu0 0.0
      %455 = vmatpush1.msra.mxu0 0.0
      %456 = vmatprep.subr.mxu0 0.0
      %457 = vmatpush1.msra.mxu0 0.0
      %458 = vmatprep.subr.mxu0 0.0
      %459 = vmatpush1.msra.mxu0 0.0
      %460 = vmatprep.subr.mxu0 0.0
      %461 = vmatpush1.msra.mxu0 0.0
      %462 = vmatprep.subr.mxu0 0.0
      %463 = vmatpush1.msra.mxu0 0.0
      %464 = vmatprep.subr.mxu0 0.0
      %465 = vmatpush1.msra.mxu0 0.0
      %466 = vmatprep.subr.mxu0 0.0
      %467 = vmatpush1.msra.mxu0 0.0
      %468 = vmatprep.subr.mxu0 0.0
      %469 = vmatpush1.msra.mxu0 %v447
      %470 = vmatprep.subr.mxu0 0.0
      %471 = vmatpush1.msra.mxu0 %v446
      %472 = vmatprep.subr.mxu0 0.0
      %473 = vmatpush1.msra.mxu0 %v445
      %474 = vmatprep.subr.mxu0 0.0
      %475 = vmatpush1.msra.mxu0 %v444
      %476 = vmatprep.subr.mxu0 0.0
      %477 = vmatpush1.msra.mxu0 %v443
      %478 = vmatprep.subr.mxu0 0.0
      %479 = vmatpush1.msra.mxu0 %v442
      %480 = vmatprep.subr.mxu0 0.0
      %481 = vmatpush2.msra.mxu0 0.0
      %482 = vmatprep.subr.mxu0 0.0
      %483 = vmatpush2.msra.mxu0 0.0
      %484 = vmatprep.subr.mxu0 0.0
      %485 = vmatpush2.msra.mxu0 0.0
      %486 = vmatprep.subr.mxu0 0.0
      %487 = vmatpush2.msra.mxu0 0.0
      %488 = vmatprep.subr.mxu0 0.0
      %489 = vmatpush2.msra.mxu0 0.0
      %490 = vmatprep.subr.mxu0 0.0
      %491 = vmatpush2.msra.mxu0 0.0
      %492 = vmatprep.subr.mxu0 0.0
      %493 = vmatpush2.msra.mxu0 0.0
      %494 = vmatprep.subr.mxu0 0.0
      %495 = vmatpush2.msra.mxu0 0.0
      %496 = vmatprep.subr.mxu0 0.0
      %497 = vmatpush2.msra.mxu0 0.0
      %498 = vmatprep.subr.mxu0 0.0
      %499 = vmatpush2.msra.mxu0 0.0
      %500 = vmatprep.subr.mxu0 0.0
      %501 = vmatpush2.msra.mxu0 0.0
      %502 = vmatprep.subr.mxu0 0.0
      %503 = vmatpush2.msra.mxu0 0.0
      %504 = vmatprep.subr.mxu0 0.0
      %505 = vmatpush2.msra.mxu0 0.0
      %506 = vmatprep.subr.mxu0 0.0
      %507 = vmatpush2.msra.mxu0 0.0
      %508 = vmatprep.subr.mxu0 0.0
      %509 = vmatpush2.msra.mxu0 0.0
      %510 = vmatprep.subr.mxu0 0.0
      %511 = vmatpush2.msra.mxu0 0.0
      %512 = vmatprep.mubr.f32.mxu0 0.0
      %513 = vmatmul.mubr.f32.gmra.mxu0 %v349
      %v514 = vpop.f32.mrf.mxu0
      %v515 = vadd.f32 0.0, %v514
      %v516 = vpop.f32.mrf.mxu0
      %517 = vdwg.mxu0
      %s518 = scvt.s32.f32 %s304
      %s519 = sadd.f32 %s518, %s346
      %v520 = vld [vmem:[#allocation2] sm:$0x1]
      %v521 = vsub.f32 %v425, %v520
      %v522 = vstv %s519
      %v523 = vrcp.pop %v522
      %s524 = vtos %v523
      %s525 = smul.f32 %s346, %s524
      %v526 = vstv %s525
      %v527 = vmul.f32 %v521, %v526
      %v528 = vadd.f32 %v520, %v527
      %529 = vst [vmem:[#allocation2] sm:$0x1] %v528
      %v530 = vld [vmem:[#allocation3] sm:$0x1]
      %v531 = vadd.f32 %v530, %v515
      %v532 = vmul.f32 %v521, %v521
      %s533 = smul.f32 %s518, %s346
      %v534 = vstv %s519
      %v535 = vrcp.pop %v534
      %s536 = vtos %v535
      %s537 = smul.f32 %s533, %s536
      %v538 = vstv %s537
      %v539 = vmul.f32 %v532, %v538
      %v540 = vadd.f32 %v531, %v539
      %541 = vst [vmem:[#allocation3] sm:$0x1] %v540
      %p542 = scmp.eq.s32.totalorder %s15, 2
      // Predicated region
      $region41: #{fwd.2} parent=35 // pred_check
        %p543 = pneg %p542
      $region42: #{fwd.2} parent=35 // pred_check_branch
        %545 = sbr.rel (%p543) target = $region44
      $region43: #{fwd.2} parent=35 // pred_region
        %v546 = vld [vmem:[#allocation2] sm:$0x1]
        %v547 = vld [vmem:[#allocation3] sm:$0x1]
        %v548 = vmul.f32 %v547, 0.0078125
        %v549 = vadd.f32 %v548, 1e-05
        %v550 = vrsqrt.pop %v549
        %v551 = vld [vmem:[%s2] sm:$0x1]
        %v552 = vmul.f32 %v551, %v550
        %v553 = vld [vmem:[%s3] sm:$0x1]
        %v554 = vmul.f32 %v546, %v552
        %v555 = vsub.f32 %v553, %v554
        %v556 = vld [vmem:[%s4] sm:$0xff]
        %v557 = vld [vmem:[%s4 + $0x8] sm:$0xff]
        %v558 = vld [vmem:[%s4 + $0x10] sm:$0xff]
        %v559 = vld [vmem:[%s4 + $0x18] sm:$0xff]
        %v560 = vld [vmem:[%s4 + $0x20] sm:$0xff]
        %v561 = vld [vmem:[%s4 + $0x28] sm:$0xff]
        %v562 = vld [vmem:[%s4 + $0x30] sm:$0xff]
        %v563 = vld [vmem:[%s4 + $0x38] sm:$0xff]
        %v564 = vld [vmem:[%s4 + $0x40] sm:$0xff]
        %v565 = vld [vmem:[%s4 + $0x48] sm:$0xff]
        %v566 = vld [vmem:[%s4 + $0x50] sm:$0xff]
        %v567 = vld [vmem:[%s4 + $0x58] sm:$0xff]
        %v568 = vld [vmem:[%s4 + $0x60] sm:$0xff]
        %v569 = vld [vmem:[%s4 + $0x68] sm:$0xff]
        %v570 = vld [vmem:[%s4 + $0x70] sm:$0xff]
        %v571 = vld [vmem:[%s4 + $0x78] sm:$0xff]
        %v572 = vld [vmem:[%s4 + $0x80] sm:$0xff]
        %v573 = vld [vmem:[%s4 + $0x88] sm:$0xff]
        %v575 = vlaneseq
        %v576 = vshrl.u32 %v575, 7
        %v577 = vsub.s32 0, %v576
        %v578 = vrot.slane %v552, %v577
        %v580 = vmul.f32 %v556, %v578
        %v581 = vmul.f32 %v557, %v578
        %v582 = vmul.f32 %v558, %v578
        %v583 = vmul.f32 %v559, %v578
        %v584 = vmul.f32 %v560, %v578
        %v585 = vmul.f32 %v561, %v578
        %v586 = vmul.f32 %v562, %v578
        %v587 = vmul.f32 %v563, %v578
        %v588 = vmul.f32 %v564, %v578
        %v589 = vmul.f32 %v565, %v578
        %v590 = vmul.f32 %v566, %v578
        %v591 = vmul.f32 %v567, %v578
        %v592 = vmul.f32 %v568, %v578
        %v593 = vmul.f32 %v569, %v578
        %v594 = vmul.f32 %v570, %v578
        %v595 = vmul.f32 %v571, %v578
        %v596 = vmul.f32 %v572, %v578
        %v597 = vmul.f32 %v573, %v578
        %v599 = vlaneseq
        %v600 = vshrl.u32 %v599, 7
        %v601 = vsub.s32 0, %v600
        %v602 = vrot.slane %v555, %v601
        %v604 = vadd.f32 %v580, %v602
        %v605 = vadd.f32 %v581, %v602
        %v606 = vadd.f32 %v582, %v602
        %v607 = vadd.f32 %v583, %v602
        %v608 = vadd.f32 %v584, %v602
        %v609 = vadd.f32 %v585, %v602
        %v610 = vadd.f32 %v586, %v602
        %v611 = vadd.f32 %v587, %v602
        %v612 = vadd.f32 %v588, %v602
        %v613 = vadd.f32 %v589, %v602
        %v614 = vadd.f32 %v590, %v602
        %v615 = vadd.f32 %v591, %v602
        %v616 = vadd.f32 %v592, %v602
        %v617 = vadd.f32 %v593, %v602
        %v618 = vadd.f32 %v594, %v602
        %v619 = vadd.f32 %v595, %v602
        %v620 = vadd.f32 %v596, %v602
        %v621 = vadd.f32 %v597, %v602
        %v622 = vmax.f32 %v604, 0.0
        %v623 = vmax.f32 %v605, 0.0
        %v624 = vmax.f32 %v606, 0.0
        %v625 = vmax.f32 %v607, 0.0
        %v626 = vmax.f32 %v608, 0.0
        %v627 = vmax.f32 %v609, 0.0
        %v628 = vmax.f32 %v610, 0.0
        %v629 = vmax.f32 %v611, 0.0
        %v630 = vmax.f32 %v612, 0.0
        %v631 = vmax.f32 %v613, 0.0
        %v632 = vmax.f32 %v614, 0.0
        %v633 = vmax.f32 %v615, 0.0
        %v634 = vmax.f32 %v616, 0.0
        %v635 = vmax.f32 %v617, 0.0
        %v636 = vmax.f32 %v618, 0.0
        %v637 = vmax.f32 %v619, 0.0
        %v638 = vmax.f32 %v620, 0.0
        %v639 = vmax.f32 %v621, 0.0
        %640 = vst [vmem:[%s4] sm:$0xff] %v622
        %641 = vst [vmem:[%s4 + $0x8] sm:$0xff] %v623
        %642 = vst [vmem:[%s4 + $0x10] sm:$0xff] %v624
        %643 = vst [vmem:[%s4 + $0x18] sm:$0xff] %v625
        %644 = vst [vmem:[%s4 + $0x20] sm:$0xff] %v626
        %645 = vst [vmem:[%s4 + $0x28] sm:$0xff] %v627
        %646 = vst [vmem:[%s4 + $0x30] sm:$0xff] %v628
        %647 = vst [vmem:[%s4 + $0x38] sm:$0xff] %v629
        %648 = vst [vmem:[%s4 + $0x40] sm:$0xff] %v630
        %649 = vst [vmem:[%s4 + $0x48] sm:$0xff] %v631
        %650 = vst [vmem:[%s4 + $0x50] sm:$0xff] %v632
        %651 = vst [vmem:[%s4 + $0x58] sm:$0xff] %v633
        %652 = vst [vmem:[%s4 + $0x60] sm:$0xff] %v634
        %653 = vst [vmem:[%s4 + $0x68] sm:$0xff] %v635
        %654 = vst [vmem:[%s4 + $0x70] sm:$0xff] %v636
        %655 = vst [vmem:[%s4 + $0x78] sm:$0xff] %v637
        %656 = vst [vmem:[%s4 + $0x80] sm:$0xff] %v638
        %657 = vst [vmem:[%s4 + $0x88] sm:$0xff] %v639
      $region44: #{fwd.2} parent=35 // pred_fallthru
        _
      // Predicated region
      $region45: #{fwd.2} parent=35 // pred_check
        %p658 = pneg %p117
      $region46: #{fwd.2} parent=35 // pred_check_branch
        %660 = sbr.rel (%p658) target = $region48
      $region47: #{fwd.2} parent=35 // pred_region
        _
      $region48: #{fwd.2} parent=35 // pred_fallthru
        _
      // Predicated region
      $region49: #{fwd.2} parent=35 // pred_check
        %p661 = pneg %p117
      $region50: #{fwd.2} parent=35 // pred_check_branch
        %663 = sbr.rel (%p661) target = $region52
      $region51: #{fwd.2} parent=35 // pred_region
        _
      $region52: #{fwd.2} parent=35 // pred_fallthru
        _
    $region36: #{fwd.2} parent=5 // pred_fallthru
      _
    %p664 = scmp.le.s32.totalorder 2, %s10
    // Predicated region
    $region53: #{fwd.2} parent=5 // pred_check
      %p665 = pneg %p664
    $region54: #{fwd.2} parent=5 // pred_check_branch
      %667 = sbr.rel (%p665) target = $region56
    $region55: #{fwd.2} parent=5 // pred_region
      %s668 = ssub.s32 %s10, 2
    $region56: #{fwd.2} parent=5 // pred_fallthru
      _
  $region6: #{fwd.2} parent=0 // loop_footer
    %s14 = sadd.s32 1, %s10
  $region7: #{fwd.2} parent=0 // loop_footer_branch
    %9 = sbr.rel target = $region3
  $region8: #{fwd.2} parent=0 // loop_exit
    _

// kernel: fwd.3
$region0: #{fwd.3}
  #allocation0 [shape = 'u32[]', space=smem, size = 0x4, offset = 0x4, fixed_abs, tag = 'smem constant byte address 0x4 - core index']
  #allocation1 [shape = 'u32[144,128]{1,0:T(1,128)}', space=vmem, size = 0x12000, scoped, tag = 'internal scratch']
  #allocation2 [shape = 'f32[1,128]{1,0:T(1,128)}', space=vmem, size = 0x200, scoped, tag = 'scratch operand']
  #allocation3 [shape = 'f32[1,128]{1,0:T(1,128)}', space=vmem, size = 0x200, scoped, tag = 'scratch operand']
  %s0 = inlined_call_operand.vmem [shape: bf16[32,72], index: 0, kind: input, shape index: {}]
  %s1 = inlined_call_operand.vmem [shape: bf16[72,128], index: 1, kind: input, shape index: {}]
  %s2 = inlined_call_operand.vmem [shape: f32[1,128], index: 2, kind: input, shape index: {}]
  %s3 = inlined_call_operand.vmem [shape: f32[1,128], index: 3, kind: input, shape index: {}]
  %s4 = inlined_call_operand.hbm [shape: f32[32,128], index: 4, kind: output, shape index: {}]
  %s5 = sld [smem:[#allocation0]]
  $region34: #{fwd.3} parent=0
    _
  %s7 = ssub.s32 1, %s5
  %s8 = scalar_select 0, %s7, %s5
  $region1: #{fwd.3} parent=0
    #allocation4 [shape = 'u8[16384]{0}', space=vmem, size = 0x4000, scoped, tag = 'output window, operand 0, single buffered']
    #allocation5 [shape = 's32[1]{0}', space=sflag, size = 0x4, scoped, tag = 'scoped memory for fwd.3']
    %9 = vsyncpa [#allocation5], 0
    // Predicated region
    $region2: #{fwd.3} parent=1 // pred_check
      _
    $region3: #{fwd.3} parent=1 // pred_check_branch
      %11 = sbr.rel (0) target = $region5
    $region4: #{fwd.3} parent=1 // pred_region
      _
    $region5: #{fwd.3} parent=1 // pred_fallthru
      _
    // Predicated region
    $region6: #{fwd.3} parent=1 // pred_check
      _
    $region7: #{fwd.3} parent=1 // pred_check_branch
      %13 = sbr.rel (0) target = $region9
    $region8: #{fwd.3} parent=1 // pred_region
      _
    $region9: #{fwd.3} parent=1 // pred_fallthru
      _
    // Predicated region
    $region10: #{fwd.3} parent=1 // pred_check
      _
    $region11: #{fwd.3} parent=1 // pred_check_branch
      %15 = sbr.rel (0) target = $region13
    $region12: #{fwd.3} parent=1 // pred_region
      _
    $region13: #{fwd.3} parent=1 // pred_fallthru
      _
    // Predicated region
    $region14: #{fwd.3} parent=1 // pred_check
      _
    $region15: #{fwd.3} parent=1 // pred_check_branch
      %17 = sbr.rel (0) target = $region17
    $region16: #{fwd.3} parent=1 // pred_region
      _
    $region17: #{fwd.3} parent=1 // pred_fallthru
      _
    %p19 = scmp.eq.s32.totalorder 0, 0
    // Predicated region
    $region18: #{fwd.3} parent=1 // pred_check
      %p20 = pneg %p19
    $region19: #{fwd.3} parent=1 // pred_check_branch
      %22 = sbr.rel (%p20) target = $region21
    $region20: #{fwd.3} parent=1 // pred_region
      %23 = vst [vmem:[#allocation2] sm:$0x1] 0.0
      %24 = vst [vmem:[#allocation3] sm:$0x1] 0.0
    $region21: #{fwd.3} parent=1 // pred_fallthru
      _
    %v25 = vld [vmem:[%s0] sm:$0xf]
    %v26 = vld [vmem:[%s0 + $0x4] sm:$0xf]
    %v27 = vld [vmem:[%s0 + $0x8] sm:$0xf]
    %v28 = vld [vmem:[%s0 + $0xc] sm:$0xf]
    %v29 = vld [vmem:[%s1] sm:$0xf]
    %v30 = vld [vmem:[%s1 + $0x4] sm:$0xf]
    %v31 = vld [vmem:[%s1 + $0x8] sm:$0xf]
    %v32 = vld [vmem:[%s1 + $0xc] sm:$0xf]
    %v33 = vld [vmem:[%s1 + $0x10] sm:$0xf]
    %v34 = vld [vmem:[%s1 + $0x14] sm:$0xf]
    %v35 = vld [vmem:[%s1 + $0x18] sm:$0xf]
    %v36 = vld [vmem:[%s1 + $0x1c] sm:$0xf]
    %v37 = vld [vmem:[%s1 + $0x20] sm:$0xf]
    %v42 = vunpack.c.l.b16 %v25
    %v43 = vunpack.c.l.b16 %v26
    %v44 = vunpack.c.l.b16 %v27
    %v45 = vunpack.c.l.b16 %v28
    %v46 = vpack.c.b16 %v43, %v42
    %v47 = vpack.c.b16 %v45, %v44
    %v57 = vunpack.c.l.b16 %v29
    %v58 = vunpack.c.l.b16 %v30
    %v59 = vunpack.c.l.b16 %v31
    %v60 = vunpack.c.l.b16 %v32
    %v61 = vunpack.c.l.b16 %v33
    %v62 = vunpack.c.l.b16 %v34
    %v63 = vunpack.c.l.b16 %v35
    %v64 = vunpack.c.l.b16 %v36
    %v65 = vunpack.c.l.b16 %v37
    %v66 = vpack.c.b16 %v58, %v57
    %v67 = vpack.c.b16 %v60, %v59
    %v68 = vpack.c.b16 %v62, %v61
    %v69 = vpack.c.b16 %v64, %v63
    %v70 = vpack.c.b16 %v65, %v65
    %vm75 = vcmask 588800
    %v77 = vsel %vm75, %v46, 0
    %v80 = vsel %vm75, %v47, 0
    %vm82 = vcmask 1043456
    %v84 = vsel %vm82, %v70, 0
    %86 = vmatprep.subr.bf16.mxu0 0
    %87 = vmatpush1.bf16.msra.mxu0 0
    %88 = vmatprep.subr.bf16.mxu0 0
    %89 = vmatpush1.bf16.msra.mxu0 0
    %90 = vmatprep.subr.bf16.mxu0 0
    %91 = vmatpush1.bf16.msra.mxu0 0
    %92 = vmatprep.subr.bf16.mxu0 0
    %93 = vmatpush1.bf16.msra.mxu0 %v84
    %94 = vmatprep.subr.bf16.mxu0 0
    %95 = vmatpush1.bf16.msra.mxu0 %v69
    %96 = vmatprep.subr.bf16.mxu0 0
    %97 = vmatpush1.bf16.msra.mxu0 %v68
    %98 = vmatprep.subr.bf16.mxu0 0
    %99 = vmatpush1.bf16.msra.mxu0 %v67
    %100 = vmatprep.subr.bf16.mxu0 0
    %101 = vmatpush1.bf16.msra.mxu0 %v66
    %102 = vmatprep.subr.bf16.mxu0 0
    %103 = vmatpush2.bf16.msra.mxu0 0
    %104 = vmatprep.subr.bf16.mxu0 0
    %105 = vmatpush2.bf16.msra.mxu0 0
    %106 = vmatprep.subr.bf16.mxu0 0
    %107 = vmatpush2.bf16.msra.mxu0 0
    %108 = vmatprep.subr.bf16.mxu0 0
    %109 = vmatpush2.bf16.msra.mxu0 0
    %110 = vmatprep.subr.bf16.mxu0 0
    %111 = vmatpush2.bf16.msra.mxu0 0
    %112 = vmatprep.subr.bf16.mxu0 0
    %113 = vmatpush2.bf16.msra.mxu0 0
    %114 = vmatprep.subr.bf16.mxu0 0
    %115 = vmatpush2.bf16.msra.mxu0 0
    %116 = vmatprep.subr.bf16.mxu0 0
    %117 = vmatpush2.bf16.msra.mxu0 0
    %118 = vmatprep.mubr.bf16.mxu0 0
    %119 = vmatmul.mubr.bf16.gmra.mxu0 %v77
    %v120 = vpop.f32.mrf.mxu0
    %v121 = vadd.f32 0.0, %v120
    %v122 = vpop.f32.mrf.mxu0
    %v123 = vpop.f32.mrf.mxu0
    %v124 = vadd.f32 0.0, %v123
    %v125 = vpop.f32.mrf.mxu0
    %126 = vmatprep.mubr.bf16.mxu0 0
    %127 = vmatmul.mubr.bf16.gmra.mxu0 %v80
    %v128 = vpop.f32.mrf.mxu0
    %v129 = vadd.f32 0.0, %v128
    %v130 = vpop.f32.mrf.mxu0
    %v131 = vpop.f32.mrf.mxu0
    %v132 = vadd.f32 0.0, %v131
    %v133 = vpop.f32.mrf.mxu0
    %134 = vdwg.mxu0
    %s135 = smul.u32 0, 32
    %s136 = scalar_lea.vmem [#allocation4], %s135
    %137 = vst [vmem:[%s136] sm:$0xff] %v121
    %138 = vst [vmem:[%s136 + $0x8] sm:$0xff] %v124
    %139 = vst [vmem:[%s136 + $0x10] sm:$0xff] %v129
    %140 = vst [vmem:[%s136 + $0x18] sm:$0xff] %v132
    %s141 = ssub.s32 32, %s135
    %p142 = scmp.lt.s32.totalorder %s141, 32
    %s143 = scalar_select %p142, %s141, 32
    %v144 = vlaneseq
    %v145 = vand.u32 %v144, 127
    %v146 = vstv %s143
    %vm147 = vcmp.lt.s32.totalorder %v145, %v146
    %v148 = vsel %vm147, 1, 0
    %v149 = vcvt.s32.f32 %v148
    %v150 = vlaneseq
    %v151 = vshrl.u32 %v150, 7
    %v152 = vadd.s32 %v151, 8
    %v153 = vadd.s32 %v151, 16
    %v154 = vadd.s32 %v151, 24
    %vm155 = vcmp.lt.s32.totalorder %v151, %v146
    %vm156 = vcmp.lt.s32.totalorder %v152, %v146
    %vm157 = vcmp.lt.s32.totalorder %v153, %v146
    %vm158 = vcmp.lt.s32.totalorder %v154, %v146
    %v159 = vsel %vm155, 1, 0
    %v160 = vsel %vm156, 1, 0
    %v161 = vsel %vm157, 1, 0
    %v162 = vsel %vm158, 1, 0
    %v163 = vcvt.s32.f32 %v159
    %v164 = vcvt.s32.f32 %v160
    %v165 = vcvt.s32.f32 %v161
    %v166 = vcvt.s32.f32 %v162
    %s167 = scvt.s32.f32 %s143
    %vm168 = vcmask 261120
    %v170 = vsel %vm168, %v149, 0
    %172 = vmatprep.subr.mxu0 0.0
    %173 = vmatpush1.msra.mxu0 0.0
    %174 = vmatprep.subr.mxu0 0.0
    %175 = vmatpush1.msra.mxu0 0.0
    %176 = vmatprep.subr.mxu0 0.0
    %177 = vmatpush1.msra.mxu0 0.0
    %178 = vmatprep.subr.mxu0 0.0
    %179 = vmatpush1.msra.mxu0 0.0
    %180 = vmatprep.subr.mxu0 0.0
    %181 = vmatpush1.msra.mxu0 0.0
    %182 = vmatprep.subr.mxu0 0.0
    %183 = vmatpush1.msra.mxu0 0.0
    %184 = vmatprep.subr.mxu0 0.0
    %185 = vmatpush1.msra.mxu0 0.0
    %186 = vmatprep.subr.mxu0 0.0
    %187 = vmatpush1.msra.mxu0 0.0
    %188 = vmatprep.subr.mxu0 0.0
    %189 = vmatpush1.msra.mxu0 0.0
    %190 = vmatprep.subr.mxu0 0.0
    %191 = vmatpush1.msra.mxu0 0.0
    %192 = vmatprep.subr.mxu0 0.0
    %193 = vmatpush1.msra.mxu0 0.0
    %194 = vmatprep.subr.mxu0 0.0
    %195 = vmatpush1.msra.mxu0 0.0
    %196 = vmatprep.subr.mxu0 0.0
    %197 = vmatpush1.msra.mxu0 %v132
    %198 = vmatprep.subr.mxu0 0.0
    %199 = vmatpush1.msra.mxu0 %v129
    %200 = vmatprep.subr.mxu0 0.0
    %201 = vmatpush1.msra.mxu0 %v124
    %202 = vmatprep.subr.mxu0 0.0
    %203 = vmatpush1.msra.mxu0 %v121
    %204 = vmatprep.subr.mxu0 0.0
    %205 = vmatpush2.msra.mxu0 0.0
    %206 = vmatprep.subr.mxu0 0.0
    %207 = vmatpush2.msra.mxu0 0.0
    %208 = vmatprep.subr.mxu0 0.0
    %209 = vmatpush2.msra.mxu0 0.0
    %210 = vmatprep.subr.mxu0 0.0
    %211 = vmatpush2.msra.mxu0 0.0
    %212 = vmatprep.subr.mxu0 0.0
    %213 = vmatpush2.msra.mxu0 0.0
    %214 = vmatprep.subr.mxu0 0.0
    %215 = vmatpush2.msra.mxu0 0.0
    %216 = vmatprep.subr.mxu0 0.0
    %217 = vmatpush2.msra.mxu0 0.0
    %218 = vmatprep.subr.mxu0 0.0
    %219 = vmatpush2.msra.mxu0 0.0
    %220 = vmatprep.subr.mxu0 0.0
    %221 = vmatpush2.msra.mxu0 0.0
    %222 = vmatprep.subr.mxu0 0.0
    %223 = vmatpush2.msra.mxu0 0.0
    %224 = vmatprep.subr.mxu0 0.0
    %225 = vmatpush2.msra.mxu0 0.0
    %226 = vmatprep.subr.mxu0 0.0
    %227 = vmatpush2.msra.mxu0 0.0
    %228 = vmatprep.subr.mxu0 0.0
    %229 = vmatpush2.msra.mxu0 0.0
    %230 = vmatprep.subr.mxu0 0.0
    %231 = vmatpush2.msra.mxu0 0.0
    %232 = vmatprep.subr.mxu0 0.0
    %233 = vmatpush2.msra.mxu0 0.0
    %234 = vmatprep.subr.mxu0 0.0
    %235 = vmatpush2.msra.mxu0 0.0
    %236 = vmatprep.mubr.f32.mxu0 0.0
    %237 = vmatmul.mubr.f32.gmra.mxu0 %v170
    %v238 = vpop.f32.mrf.mxu0
    %v239 = vadd.f32 0.0, %v238
    %v240 = vpop.f32.mrf.mxu0
    %241 = vdwg.mxu0
    %v242 = vstv %s167
    %v243 = vrcp.pop %v242
    %s244 = vtos %v243
    %v245 = vstv %s244
    %v246 = vmul.f32 %v239, %v245
    %v247 = vlaneseq
    %v248 = vshrl.u32 %v247, 7
    %v249 = vsub.s32 0, %v248
    %v250 = vrot.slane %v246, %v249
    %v251 = vsub.f32 %v121, %v250
    %v252 = vsub.f32 %v124, %v250
    %v253 = vsub.f32 %v129, %v250
    %v254 = vsub.f32 %v132, %v250
    %v255 = vmul.f32 %v251, %v163
    %v256 = vmul.f32 %v252, %v164
    %v257 = vmul.f32 %v253, %v165
    %v258 = vmul.f32 %v254, %v166
    %v259 = vmul.f32 %v255, %v255
    %v260 = vmul.f32 %v256, %v256
    %v261 = vmul.f32 %v257, %v257
    %v262 = vmul.f32 %v258, %v258
    %263 = vmatprep.subr.mxu0 0.0
    %264 = vmatpush1.msra.mxu0 0.0
    %265 = vmatprep.subr.mxu0 0.0
    %266 = vmatpush1.msra.mxu0 0.0
    %267 = vmatprep.subr.mxu0 0.0
    %268 = vmatpush1.msra.mxu0 0.0
    %269 = vmatprep.subr.mxu0 0.0
    %270 = vmatpush1.msra.mxu0 0.0
    %271 = vmatprep.subr.mxu0 0.0
    %272 = vmatpush1.msra.mxu0 0.0
    %273 = vmatprep.subr.mxu0 0.0
    %274 = vmatpush1.msra.mxu0 0.0
    %275 = vmatprep.subr.mxu0 0.0
    %276 = vmatpush1.msra.mxu0 0.0
    %277 = vmatprep.subr.mxu0 0.0
    %278 = vmatpush1.msra.mxu0 0.0
    %279 = vmatprep.subr.mxu0 0.0
    %280 = vmatpush1.msra.mxu0 0.0
    %281 = vmatprep.subr.mxu0 0.0
    %282 = vmatpush1.msra.mxu0 0.0
    %283 = vmatprep.subr.mxu0 0.0
    %284 = vmatpush1.msra.mxu0 0.0
    %285 = vmatprep.subr.mxu0 0.0
    %286 = vmatpush1.msra.mxu0 0.0
    %287 = vmatprep.subr.mxu0 0.0
    %288 = vmatpush1.msra.mxu0 %v262
    %289 = vmatprep.subr.mxu0 0.0
    %290 = vmatpush1.msra.mxu0 %v261
    %291 = vmatprep.subr.mxu0 0.0
    %292 = vmatpush1.msra.mxu0 %v260
    %293 = vmatprep.subr.mxu0 0.0
    %294 = vmatpush1.msra.mxu0 %v259
    %295 = vmatprep.subr.mxu0 0.0
    %296 = vmatpush2.msra.mxu0 0.0
    %297 = vmatprep.subr.mxu0 0.0
    %298 = vmatpush2.msra.mxu0 0.0
    %299 = vmatprep.subr.mxu0 0.0
    %300 = vmatpush2.msra.mxu0 0.0
    %301 = vmatprep.subr.mxu0 0.0
    %302 = vmatpush2.msra.mxu0 0.0
    %303 = vmatprep.subr.mxu0 0.0
    %304 = vmatpush2.msra.mxu0 0.0
    %305 = vmatprep.subr.mxu0 0.0
    %306 = vmatpush2.msra.mxu0 0.0
    %307 = vmatprep.subr.mxu0 0.0
    %308 = vmatpush2.msra.mxu0 0.0
    %309 = vmatprep.subr.mxu0 0.0
    %310 = vmatpush2.msra.mxu0 0.0
    %311 = vmatprep.subr.mxu0 0.0
    %312 = vmatpush2.msra.mxu0 0.0
    %313 = vmatprep.subr.mxu0 0.0
    %314 = vmatpush2.msra.mxu0 0.0
    %315 = vmatprep.subr.mxu0 0.0
    %316 = vmatpush2.msra.mxu0 0.0
    %317 = vmatprep.subr.mxu0 0.0
    %318 = vmatpush2.msra.mxu0 0.0
    %319 = vmatprep.subr.mxu0 0.0
    %320 = vmatpush2.msra.mxu0 0.0
    %321 = vmatprep.subr.mxu0 0.0
    %322 = vmatpush2.msra.mxu0 0.0
    %323 = vmatprep.subr.mxu0 0.0
    %324 = vmatpush2.msra.mxu0 0.0
    %325 = vmatprep.subr.mxu0 0.0
    %326 = vmatpush2.msra.mxu0 0.0
    %327 = vmatprep.mubr.f32.mxu0 0.0
    %328 = vmatmul.mubr.f32.gmra.mxu0 %v170
    %v329 = vpop.f32.mrf.mxu0
    %v330 = vadd.f32 0.0, %v329
    %v331 = vpop.f32.mrf.mxu0
    %332 = vdwg.mxu0
    %s333 = scvt.s32.f32 %s135
    %s334 = sadd.f32 %s333, %s167
    %v335 = vld [vmem:[#allocation2] sm:$0x1]
    %v336 = vsub.f32 %v246, %v335
    %v337 = vstv %s334
    %v338 = vrcp.pop %v337
    %s339 = vtos %v338
    %s340 = smul.f32 %s167, %s339
    %v341 = vstv %s340
    %v342 = vmul.f32 %v336, %v341
    %v343 = vadd.f32 %v335, %v342
    %344 = vst [vmem:[#allocation2] sm:$0x1] %v343
    %v345 = vld [vmem:[#allocation3] sm:$0x1]
    %v346 = vadd.f32 %v345, %v330
    %v347 = vmul.f32 %v336, %v336
    %s348 = smul.f32 %s333, %s167
    %v349 = vstv %s334
    %v350 = vrcp.pop %v349
    %s351 = vtos %v350
    %s352 = smul.f32 %s348, %s351
    %v353 = vstv %s352
    %v354 = vmul.f32 %v347, %v353
    %v355 = vadd.f32 %v346, %v354
    %356 = vst [vmem:[#allocation3] sm:$0x1] %v355
    // Predicated region
    $region22: #{fwd.3} parent=1 // pred_check
      %p357 = pneg %p19
    $region23: #{fwd.3} parent=1 // pred_check_branch
      %359 = sbr.rel (%p357) target = $region25
    $region24: #{fwd.3} parent=1 // pred_region
      %v360 = vld [vmem:[#allocation2] sm:$0x1]
      %v361 = vld [vmem:[#allocation3] sm:$0x1]
      %v362 = vmul.f32 %v361, 0.03125
      %v363 = vadd.f32 %v362, 1e-05
      %v364 = vrsqrt.pop %v363
      %v365 = vld [vmem:[%s2] sm:$0x1]
      %v366 = vmul.f32 %v365, %v364
      %v367 = vld [vmem:[%s3] sm:$0x1]
      %v368 = vmul.f32 %v360, %v366
      %v369 = vsub.f32 %v367, %v368
      %v370 = vld [vmem:[#allocation4] sm:$0xff]
      %v371 = vld [vmem:[#allocation4 + $0x8] sm:$0xff]
      %v372 = vld [vmem:[#allocation4 + $0x10] sm:$0xff]
      %v373 = vld [vmem:[#allocation4 + $0x18] sm:$0xff]
      %v375 = vlaneseq
      %v376 = vshrl.u32 %v375, 7
      %v377 = vsub.s32 0, %v376
      %v378 = vrot.slane %v366, %v377
      %v380 = vmul.f32 %v370, %v378
      %v381 = vmul.f32 %v371, %v378
      %v382 = vmul.f32 %v372, %v378
      %v383 = vmul.f32 %v373, %v378
      %v385 = vlaneseq
      %v386 = vshrl.u32 %v385, 7
      %v387 = vsub.s32 0, %v386
      %v388 = vrot.slane %v369, %v387
      %v390 = vadd.f32 %v380, %v388
      %v391 = vadd.f32 %v381, %v388
      %v392 = vadd.f32 %v382, %v388
      %v393 = vadd.f32 %v383, %v388
      %394 = vst [vmem:[#allocation4] sm:$0xff] %v390
      %395 = vst [vmem:[#allocation4 + $0x8] sm:$0xff] %v391
      %396 = vst [vmem:[#allocation4 + $0x10] sm:$0xff] %v392
      %397 = vst [vmem:[#allocation4 + $0x18] sm:$0xff] %v393
    $region25: #{fwd.3} parent=1 // pred_fallthru
      _
    // Predicated region
    $region26: #{fwd.3} parent=1 // pred_check
      _
    $region27: #{fwd.3} parent=1 // pred_check_branch
      %399 = sbr.rel (0) target = $region29
    $region28: #{fwd.3} parent=1 // pred_region
      %s401 = ssub.s32 512, 512
      %402 = vsyncadd [#allocation5], %s401
      %s403 = sshll.u32 [#allocation4], 4
      %s404 = int_to_ptr.vmem [resolvable:$true] %s403
      %409 = dma.vmem_to_hbm [thread:$0]  %s404, 512, %s4, [#allocation5], 128, 128, 8
    $region29: #{fwd.3} parent=1 // pred_fallthru
      _
    // Predicated region
    $region30: #{fwd.3} parent=1 // pred_check
      _
    $region31: #{fwd.3} parent=1 // pred_check_branch
      %411 = sbr.rel (0) target = $region33
    $region32: #{fwd.3} parent=1 // pred_region
      %412 = dma.done [#allocation5], 512
    $region33: #{fwd.3} parent=1 // pred_fallthru
      _
    %413 = vsyncpa [#allocation5], 1

</llo_original>
